<compile_context>
chip_gen: v5e
topology: v5e:2x2
jax: 0.10.0
libtpu: 0.0.40
codegen_flags: <defaults>
</compile_context>

<pallas_src>
import jax
import jax.numpy as jnp
from jax import lax
from jax.experimental import pallas as pl
from jax.experimental.pallas import tpu as pltpu

# ---------------- model configuration (BasicBneck cfg) ----------------
B = 2           # batch
CIN = 8         # cfg.input_channels
CEXP = 16       # cfg.expanded_channels
COUT = 8        # cfg.out_channels (== CIN -> residual is identity)
CSQ = 8         # _make_divisible(CEXP // 4, 8) = 8  (causal=False -> mult=1)
T, H, W = 4, 8, 8          # temporal / spatial extents (powers of two)
THW = T * H * W            # 256 lanes per batch slab
KT, KH, KW = 3, 3, 3

# The masked circular-roll depthwise conv relies on power-of-two dims:
#   - per-lane (t,h,w) decode uses bit fields,
#   - W | H*W | THW so coarser shifts leave finer coordinates (and masks) intact.
def _is_pow2(n):
    return n > 0 and (n & (n - 1)) == 0
assert _is_pow2(T) and _is_pow2(H) and _is_pow2(W), "T,H,W must be powers of two"
WB = W.bit_length() - 1          # 3
HWB = (H * W).bit_length() - 1   # 6

# Batch slabs handled per kernel invocation.  == B  -> single invocation (best
# on single-TC v5e/v6e).  Set to 1 on multi-TC chips (v7x) so the "parallel"
# batch grid is sharded across TensorCores.
BATCH_PER_CALL = B


# ---------------- Pallas kernel: whole bottleneck ----------------
def bneck_kernel(x_ref, w_exp_ref, w_dw_ref, w_fc1_ref, b_fc1_ref,
                 w_fc2_ref, b_fc2_ref, w_proj_ref, alpha_ref, o_ref):
    # Channels-in-sublanes / flattened (b,t,h,w)-in-lanes layout.
    nb = x_ref.shape[0]          # batch slabs in this invocation (static)
    lanes = nb * THW             # lane width of every activation tensor

    # ---- expand: 1x1x1 conv (CEXP,CIN)@(CIN,lanes) + SiLU  (MXU + EUP) ----
    if nb == 1:
        x = x_ref[0]
    else:
        x = jnp.concatenate([x_ref[j] for j in range(nb)], axis=1)   # (CIN, lanes)
    exp = jax.nn.silu(jnp.dot(w_exp_ref[...], x,
                              preferred_element_type=jnp.float32))   # (CEXP, lanes)

    # ---- deep: depthwise 3x3x3 conv, stride 1, pad 1, + SiLU ----
    # Hierarchically factored masked circular lane-rolls (W -> H -> T).
    lane = lax.broadcasted_iota(jnp.int32, (1, lanes), 1)
    tq = (lane >> HWB) & (T - 1)
    hq = (lane >> WB) & (H - 1)
    wq = lane & (W - 1)
    f32 = jnp.float32
    mw_m = (wq >= 1).astype(f32)
    mw_p = (wq <= W - 2).astype(f32)
    mh_m = (hq >= 1).astype(f32)
    mh_p = (hq <= H - 2).astype(f32)
    mt_m = (tq >= 1).astype(f32)
    mt_p = (tq <= T - 2).astype(f32)

    # Stage W: 3 masked W-shifted copies (2 XLU rolls + 2 mask mults).
    #   tw[kw][l] = exp[l + (kw-1)]  with zero padding at W boundaries.
    tw = (pltpu.roll(exp, 1, axis=1) * mw_m,          # kw=0 (ow=-1)
          exp,                                        # kw=1 (ow= 0)
          pltpu.roll(exp, lanes - 1, axis=1) * mw_p)  # kw=2 (ow=+1)

    w_dw = w_dw_ref[...]                              # (CEXP, 27)

    # Stages H and T, interleaved to keep the live vreg set small.
    acc = None
    for kt in range(KT):
        row_sum = None
        for kh in range(KH):
            ti = kt * (KH * KW) + kh * KW
            # per-(kt,kh) weighted sum over kw: pure VALU FMAs on the W-taps.
            g = (w_dw[:, ti:ti + 1] * tw[0]
                 + w_dw[:, ti + 1:ti + 2] * tw[1]
                 + w_dw[:, ti + 2:ti + 3] * tw[2])
            # H shift: roll by +/-W, mask at the destination.  mask_w stays
            # valid because shifts of W leave the low-order w bits unchanged.
            if kh == 0:
                g = pltpu.roll(g, W, axis=1) * mh_m
            elif kh == 2:
                g = pltpu.roll(g, lanes - W, axis=1) * mh_p
            row_sum = g if row_sum is None else row_sum + g
        # T shift: roll by +/-(H*W), mask at the destination.
        if kt == 0:
            row_sum = pltpu.roll(row_sum, H * W, axis=1) * mt_m
        elif kt == 2:
            row_sum = pltpu.roll(row_sum, lanes - H * W, axis=1) * mt_p
        acc = row_sum if acc is None else acc + row_sum
    dw = jax.nn.silu(acc)                             # (CEXP, lanes)

    # ---- squeeze-excitation (causal=False: global mean over T,H,W per batch) ----
    # Batched SE: one fc1/SiLU/fc2/sigmoid chain over all nb pooled columns.
    pooled = jnp.concatenate(
        [jnp.mean(dw[:, j * THW:(j + 1) * THW], axis=1, keepdims=True)
         for j in range(nb)], axis=1)                 # (CEXP, nb)
    z = jnp.dot(w_fc1_ref[...], pooled,
                preferred_element_type=jnp.float32) + b_fc1_ref[...]
    z = jax.nn.silu(z)                                # activation_1 = SiLU
    z = jnp.dot(w_fc2_ref[...], z,
                preferred_element_type=jnp.float32) + b_fc2_ref[...]
    sc = jax.nn.sigmoid(z)                            # activation_2 = Sigmoid, (CEXP, nb)

    # ---- scale, project (1x1x1, no act), residual + alpha*x; per-slab stores ----
    alpha = alpha_ref[0]                              # scalar from SMEM
    for j in range(nb):
        lo = j * THW
        dws = dw[:, lo:lo + THW] * sc[:, j:j + 1]
        y = jnp.dot(w_proj_ref[...], dws,
                    preferred_element_type=jnp.float32)   # (COUT, THW)
        o_ref[j] = x_ref[j] + alpha * y               # lane-dense store


@jax.jit
def basic_bneck(x_ncdhw, w_exp, w_dw, w_fc1, b_fc1, w_fc2, b_fc2, w_proj, alpha):
    nb = BATCH_PER_CALL
    assert B % nb == 0
    # Free reshape of NCDHW -> (B, C, T*H*W); no transposes around the kernel.
    x3 = x_ncdhw.reshape(B, CIN, THW).astype(jnp.float32)
    alpha1 = jnp.reshape(alpha, (1,)).astype(jnp.float32)

    out3 = pl.pallas_call(
        bneck_kernel,
        out_shape=jax.ShapeDtypeStruct((B, COUT, THW), jnp.float32),
        grid=(B // nb,),
        in_specs=[
            pl.BlockSpec((nb, CIN, THW), lambda i: (i, 0, 0)),        # x slabs
            pl.BlockSpec((CEXP, CIN), lambda i: (0, 0)),              # w_exp
            pl.BlockSpec((CEXP, KT * KH * KW), lambda i: (0, 0)),     # w_dw
            pl.BlockSpec((CSQ, CEXP), lambda i: (0, 0)),              # w_fc1
            pl.BlockSpec((CSQ, 1), lambda i: (0, 0)),                 # b_fc1
            pl.BlockSpec((CEXP, CSQ), lambda i: (0, 0)),              # w_fc2
            pl.BlockSpec((CEXP, 1), lambda i: (0, 0)),                # b_fc2
            pl.BlockSpec((COUT, CEXP), lambda i: (0, 0)),             # w_proj
            pl.BlockSpec(memory_space=pltpu.MemorySpace.SMEM),        # alpha (1,)
        ],
        out_specs=pl.BlockSpec((nb, COUT, THW), lambda i: (i, 0, 0)),
        compiler_params=pltpu.CompilerParams(
            dimension_semantics=("parallel",)),
    )(x3, w_exp, w_dw, w_fc1, b_fc1, w_fc2, b_fc2, w_proj, alpha1)

    # Free reshape back to PyTorch NCDHW.
    return out3.reshape(B, COUT, T, H, W)


# ---------------- pure-JAX reference (numeric sanity check) ----------------
def reference(x_ncdhw, w_exp, w_dw, w_fc1, b_fc1, w_fc2, b_fc2, w_proj, alpha):
    x = jnp.transpose(x_ncdhw, (0, 2, 3, 4, 1)).astype(jnp.float32)     # NDHWC
    exp = jax.nn.silu(jnp.einsum('bthwc,oc->bthwo', x, w_exp))
    dw_w = jnp.transpose(w_dw.reshape(CEXP, KT, KH, KW), (1, 2, 3, 0))[:, :, :, None, :]
    dw = lax.conv_general_dilated(
        exp, dw_w, window_strides=(1, 1, 1),
        padding=((1, 1), (1, 1), (1, 1)),
        dimension_numbers=('NDHWC', 'DHWIO', 'NDHWC'),
        feature_group_count=CEXP)
    dw = jax.nn.silu(dw)
    s = jnp.mean(dw, axis=(1, 2, 3), keepdims=True)
    s1 = jax.nn.silu(jnp.einsum('bthwc,oc->bthwo', s, w_fc1) + b_fc1.reshape(1, 1, 1, 1, CSQ))
    s2 = jax.nn.sigmoid(jnp.einsum('bthwc,oc->bthwo', s1, w_fc2) + b_fc2.reshape(1, 1, 1, 1, CEXP))
    y = jnp.einsum('bthwc,oc->bthwo', dw * s2, w_proj)
    out = x + alpha * y
    return jnp.transpose(out, (0, 4, 1, 2, 3))


if __name__ == "__main__":
    key = jax.random.PRNGKey(0)
    keys = jax.random.split(key, 8)

    # input in PyTorch NCDHW layout: (B, C, T, H, W)
    x = jax.random.normal(keys[0], (B, CIN, T, H, W), jnp.float32)

    # parameters (shapes from the module's __init__), kernel-friendly layout:
    #   Conv3d 1x1x1 weights squeezed to (out, in); depthwise (CEXP, 27).
    w_exp = jax.random.normal(keys[1], (CEXP, CIN), jnp.float32) * 0.1          # expand, no bias
    w_dw = jax.random.normal(keys[2], (CEXP, KT * KH * KW), jnp.float32) * 0.1  # depthwise 3x3x3
    w_fc1 = jax.random.normal(keys[3], (CSQ, CEXP), jnp.float32) * 0.1          # SE fc1 (bias=True)
    b_fc1 = jax.random.normal(keys[4], (CSQ, 1), jnp.float32) * 0.1
    w_fc2 = jax.random.normal(keys[5], (CEXP, CSQ), jnp.float32) * 0.1          # SE fc2 (bias=True)
    b_fc2 = jax.random.normal(keys[6], (CEXP, 1), jnp.float32) * 0.1
    w_proj = jax.random.normal(keys[7], (COUT, CEXP), jnp.float32) * 0.1        # project, no bias
    # alpha is initialized to 0.0 in __init__; use a deterministic nonzero value
    # so the whole compute path contributes to the output.
    alpha = jnp.float32(0.75)

    out = basic_bneck(x, w_exp, w_dw, w_fc1, b_fc1, w_fc2, b_fc2, w_proj, alpha)
    out = jax.block_until_ready(out)

    ref = reference(x, w_exp, w_dw, w_fc1, b_fc1, w_fc2, b_fc2, w_proj, alpha)
    assert out.shape == (B, COUT, T, H, W), out.shape
    assert jnp.allclose(out, ref, rtol=1e-4, atol=1e-4), float(jnp.max(jnp.abs(out - ref)))

    # TODO(synk): causal streaming state (CausalModule buffers, TemporalCGAvgPool3D
    # cumulative average) and the tf_like / strided-residual (AvgPool3d, tfAvgPool3D)
    # paths are not exercised by this non-causal, stride-(1,1,1) configuration.
    print("KERNEL_OK")
</pallas_src>

<mosaic_0001>
module attributes {stable_mosaic.version = 11 : i64} {
  func.func @bneck_kernel(%arg0: i32, %arg1: memref<2x8x256xf32, #tpu.memory_space<vmem>>, %arg2: memref<16x8xf32, #tpu.memory_space<vmem>>, %arg3: memref<16x27xf32, #tpu.memory_space<vmem>>, %arg4: memref<8x16xf32, #tpu.memory_space<vmem>>, %arg5: memref<8x1xf32, #tpu.memory_space<vmem>>, %arg6: memref<16x8xf32, #tpu.memory_space<vmem>>, %arg7: memref<16x1xf32, #tpu.memory_space<vmem>>, %arg8: memref<8x16xf32, #tpu.memory_space<vmem>>, %arg9: memref<1xf32, #tpu.memory_space<smem>>, %arg10: memref<2x8x256xf32, #tpu.memory_space<vmem>>) attributes {dimension_semantics = [#tpu.dimension_semantics<parallel>], iteration_bounds = array<i64: 1>, scalar_prefetch = 0 : i64, scratch_operands = 0 : i64, tpu.core_type = #tpu.core_type<tc>, window_params = [{transform_indices = @transform_0, window_bounds = array<i64: 2, 8, 256>}, {pipeline_mode = #tpu.pipeline_mode<synchronous>, transform_indices = @transform_1, window_bounds = array<i64: 16, 8>}, {pipeline_mode = #tpu.pipeline_mode<synchronous>, transform_indices = @transform_2, window_bounds = array<i64: 16, 27>}, {pipeline_mode = #tpu.pipeline_mode<synchronous>, transform_indices = @transform_3, window_bounds = array<i64: 8, 16>}, {pipeline_mode = #tpu.pipeline_mode<synchronous>, transform_indices = @transform_4, window_bounds = array<i64: 8, 1>}, {pipeline_mode = #tpu.pipeline_mode<synchronous>, transform_indices = @transform_5, window_bounds = array<i64: 16, 8>}, {pipeline_mode = #tpu.pipeline_mode<synchronous>, transform_indices = @transform_6, window_bounds = array<i64: 16, 1>}, {pipeline_mode = #tpu.pipeline_mode<synchronous>, transform_indices = @transform_7, window_bounds = array<i64: 8, 16>}, {transform_indices = @transform_8, window_bounds = array<i64: 1>}, {transform_indices = @transform_9, window_bounds = array<i64: 2, 8, 256>}]} {
    %c0 = arith.constant 0 : index
    %c0_0 = arith.constant 0 : index
    %c0_1 = arith.constant 0 : index
    %0 = vector.load %arg1[%c0, %c0_0, %c0_1] : memref<2x8x256xf32, #tpu.memory_space<vmem>>, vector<1x8x256xf32>
    %1 = vector.shape_cast %0 : vector<1x8x256xf32> to vector<8x256xf32>
    %c1 = arith.constant 1 : index
    %c0_2 = arith.constant 0 : index
    %c0_3 = arith.constant 0 : index
    %2 = vector.load %arg1[%c1, %c0_2, %c0_3] : memref<2x8x256xf32, #tpu.memory_space<vmem>>, vector<1x8x256xf32>
    %3 = vector.shape_cast %2 : vector<1x8x256xf32> to vector<8x256xf32>
    %4 = tpu.concatenate %1, %3 in 1 : vector<8x256xf32>, vector<8x256xf32> -> vector<8x512xf32>
    %c0_4 = arith.constant 0 : index
    %c0_5 = arith.constant 0 : index
    %5 = vector.load %arg2[%c0_4, %c0_5] : memref<16x8xf32, #tpu.memory_space<vmem>>, vector<16x8xf32>
    %cst = arith.constant dense<0.000000e+00> : vector<16x512xf32>
    %6 = tpu.matmul %5, %4, %cst {dimension_numbers = #tpu.dot_dimension_numbers<[1], [0], [0], [1], [0, 0, 1, 1], [], []>} : vector<16x8xf32>, vector<8x512xf32>, vector<16x512xf32> -> vector<16x512xf32>
    %7 = arith.negf %6 : vector<16x512xf32>
    %8 = math.exp %7 : vector<16x512xf32>
    %cst_6 = arith.constant 1.000000e+00 : f32
    %9 = vector.broadcast %cst_6 : f32 to vector<16x512xf32>
    %10 = arith.addf %9, %8 : vector<16x512xf32>
    %11 = arith.divf %9, %10 : vector<16x512xf32>
    %12 = arith.mulf %6, %11 : vector<16x512xf32>
    %13 = tpu.iota {dimensions = array<i32: 1>} : vector<1x512xi32>
    %c6_i32 = arith.constant 6 : i32
    %14 = vector.broadcast %c6_i32 : i32 to vector<1x512xi32>
    %15 = arith.shrsi %13, %14 : vector<1x512xi32>
    %c3_i32 = arith.constant 3 : i32
    %16 = vector.broadcast %c3_i32 : i32 to vector<1x512xi32>
    %17 = arith.andi %15, %16 : vector<1x512xi32>
    %c3_i32_7 = arith.constant 3 : i32
    %18 = vector.broadcast %c3_i32_7 : i32 to vector<1x512xi32>
    %19 = arith.shrsi %13, %18 : vector<1x512xi32>
    %c7_i32 = arith.constant 7 : i32
    %20 = vector.broadcast %c7_i32 : i32 to vector<1x512xi32>
    %21 = arith.andi %19, %20 : vector<1x512xi32>
    %c7_i32_8 = arith.constant 7 : i32
    %22 = vector.broadcast %c7_i32_8 : i32 to vector<1x512xi32>
    %23 = arith.andi %13, %22 : vector<1x512xi32>
    %c1_i32 = arith.constant 1 : i32
    %24 = vector.broadcast %c1_i32 : i32 to vector<1x512xi32>
    %25 = arith.cmpi sge, %23, %24 : vector<1x512xi32>
    %26 = arith.extui %25 : vector<1x512xi1> to vector<1x512xi32>
    %27 = arith.sitofp %26 : vector<1x512xi32> to vector<1x512xf32>
    %c6_i32_9 = arith.constant 6 : i32
    %28 = vector.broadcast %c6_i32_9 : i32 to vector<1x512xi32>
    %29 = arith.cmpi sle, %23, %28 : vector<1x512xi32>
    %30 = arith.extui %29 : vector<1x512xi1> to vector<1x512xi32>
    %31 = arith.sitofp %30 : vector<1x512xi32> to vector<1x512xf32>
    %c1_i32_10 = arith.constant 1 : i32
    %32 = vector.broadcast %c1_i32_10 : i32 to vector<1x512xi32>
    %33 = arith.cmpi sge, %21, %32 : vector<1x512xi32>
    %34 = arith.extui %33 : vector<1x512xi1> to vector<1x512xi32>
    %35 = arith.sitofp %34 : vector<1x512xi32> to vector<1x512xf32>
    %c6_i32_11 = arith.constant 6 : i32
    %36 = vector.broadcast %c6_i32_11 : i32 to vector<1x512xi32>
    %37 = arith.cmpi sle, %21, %36 : vector<1x512xi32>
    %38 = arith.extui %37 : vector<1x512xi1> to vector<1x512xi32>
    %39 = arith.sitofp %38 : vector<1x512xi32> to vector<1x512xf32>
    %c1_i32_12 = arith.constant 1 : i32
    %40 = vector.broadcast %c1_i32_12 : i32 to vector<1x512xi32>
    %41 = arith.cmpi sge, %17, %40 : vector<1x512xi32>
    %42 = arith.extui %41 : vector<1x512xi1> to vector<1x512xi32>
    %43 = arith.sitofp %42 : vector<1x512xi32> to vector<1x512xf32>
    %c2_i32 = arith.constant 2 : i32
    %44 = vector.broadcast %c2_i32 : i32 to vector<1x512xi32>
    %45 = arith.cmpi sle, %17, %44 : vector<1x512xi32>
    %46 = arith.extui %45 : vector<1x512xi1> to vector<1x512xi32>
    %47 = arith.sitofp %46 : vector<1x512xi32> to vector<1x512xf32>
    %c1_i32_13 = arith.constant 1 : i32
    %48 = tpu.dynamic_rotate %12 by %c1_i32_13 dim 1 : vector<16x512xf32>, i32 -> vector<16x512xf32>
    %49 = vector.broadcast %27 : vector<1x512xf32> to vector<16x512xf32>
    %50 = arith.mulf %48, %49 : vector<16x512xf32>
    %c511_i32 = arith.constant 511 : i32
    %51 = tpu.dynamic_rotate %12 by %c511_i32 dim 1 : vector<16x512xf32>, i32 -> vector<16x512xf32>
    %52 = vector.broadcast %31 : vector<1x512xf32> to vector<16x512xf32>
    %53 = arith.mulf %51, %52 : vector<16x512xf32>
    %c0_14 = arith.constant 0 : index
    %c0_15 = arith.constant 0 : index
    %54 = vector.load %arg3[%c0_14, %c0_15] : memref<16x27xf32, #tpu.memory_space<vmem>>, vector<16x27xf32>
    %55 = vector.extract_strided_slice %54 {offsets = [0, 0], sizes = [16, 1], strides = [1, 1]} : vector<16x27xf32> to vector<16x1xf32>
    %56 = vector.broadcast %55 : vector<16x1xf32> to vector<16x512xf32>
    %57 = arith.mulf %56, %50 : vector<16x512xf32>
    %58 = vector.extract_strided_slice %54 {offsets = [0, 1], sizes = [16, 1], strides = [1, 1]} : vector<16x27xf32> to vector<16x1xf32>
    %59 = vector.broadcast %58 : vector<16x1xf32> to vector<16x512xf32>
    %60 = arith.mulf %59, %12 : vector<16x512xf32>
    %61 = arith.addf %57, %60 : vector<16x512xf32>
    %62 = vector.extract_strided_slice %54 {offsets = [0, 2], sizes = [16, 1], strides = [1, 1]} : vector<16x27xf32> to vector<16x1xf32>
    %63 = vector.broadcast %62 : vector<16x1xf32> to vector<16x512xf32>
    %64 = arith.mulf %63, %53 : vector<16x512xf32>
    %65 = arith.addf %61, %64 : vector<16x512xf32>
    %c8_i32 = arith.constant 8 : i32
    %66 = tpu.dynamic_rotate %65 by %c8_i32 dim 1 : vector<16x512xf32>, i32 -> vector<16x512xf32>
    %67 = vector.broadcast %35 : vector<1x512xf32> to vector<16x512xf32>
    %68 = arith.mulf %66, %67 : vector<16x512xf32>
    %69 = vector.extract_strided_slice %54 {offsets = [0, 3], sizes = [16, 1], strides = [1, 1]} : vector<16x27xf32> to vector<16x1xf32>
    %70 = vector.broadcast %69 : vector<16x1xf32> to vector<16x512xf32>
    %71 = arith.mulf %70, %50 : vector<16x512xf32>
    %72 = vector.extract_strided_slice %54 {offsets = [0, 4], sizes = [16, 1], strides = [1, 1]} : vector<16x27xf32> to vector<16x1xf32>
    %73 = vector.broadcast %72 : vector<16x1xf32> to vector<16x512xf32>
    %74 = arith.mulf %73, %12 : vector<16x512xf32>
    %75 = arith.addf %71, %74 : vector<16x512xf32>
    %76 = vector.extract_strided_slice %54 {offsets = [0, 5], sizes = [16, 1], strides = [1, 1]} : vector<16x27xf32> to vector<16x1xf32>
    %77 = vector.broadcast %76 : vector<16x1xf32> to vector<16x512xf32>
    %78 = arith.mulf %77, %53 : vector<16x512xf32>
    %79 = arith.addf %75, %78 : vector<16x512xf32>
    %80 = arith.addf %68, %79 : vector<16x512xf32>
    %81 = vector.extract_strided_slice %54 {offsets = [0, 6], sizes = [16, 1], strides = [1, 1]} : vector<16x27xf32> to vector<16x1xf32>
    %82 = vector.broadcast %81 : vector<16x1xf32> to vector<16x512xf32>
    %83 = arith.mulf %82, %50 : vector<16x512xf32>
    %84 = vector.extract_strided_slice %54 {offsets = [0, 7], sizes = [16, 1], strides = [1, 1]} : vector<16x27xf32> to vector<16x1xf32>
    %85 = vector.broadcast %84 : vector<16x1xf32> to vector<16x512xf32>
    %86 = arith.mulf %85, %12 : vector<16x512xf32>
    %87 = arith.addf %83, %86 : vector<16x512xf32>
    %88 = vector.extract_strided_slice %54 {offsets = [0, 8], sizes = [16, 1], strides = [1, 1]} : vector<16x27xf32> to vector<16x1xf32>
    %89 = vector.broadcast %88 : vector<16x1xf32> to vector<16x512xf32>
    %90 = arith.mulf %89, %53 : vector<16x512xf32>
    %91 = arith.addf %87, %90 : vector<16x512xf32>
    %c504_i32 = arith.constant 504 : i32
    %92 = tpu.dynamic_rotate %91 by %c504_i32 dim 1 : vector<16x512xf32>, i32 -> vector<16x512xf32>
    %93 = vector.broadcast %39 : vector<1x512xf32> to vector<16x512xf32>
    %94 = arith.mulf %92, %93 : vector<16x512xf32>
    %95 = arith.addf %80, %94 : vector<16x512xf32>
    %c64_i32 = arith.constant 64 : i32
    %96 = tpu.dynamic_rotate %95 by %c64_i32 dim 1 : vector<16x512xf32>, i32 -> vector<16x512xf32>
    %97 = vector.broadcast %43 : vector<1x512xf32> to vector<16x512xf32>
    %98 = arith.mulf %96, %97 : vector<16x512xf32>
    %99 = vector.extract_strided_slice %54 {offsets = [0, 9], sizes = [16, 1], strides = [1, 1]} : vector<16x27xf32> to vector<16x1xf32>
    %100 = vector.broadcast %99 : vector<16x1xf32> to vector<16x512xf32>
    %101 = arith.mulf %100, %50 : vector<16x512xf32>
    %102 = vector.extract_strided_slice %54 {offsets = [0, 10], sizes = [16, 1], strides = [1, 1]} : vector<16x27xf32> to vector<16x1xf32>
    %103 = vector.broadcast %102 : vector<16x1xf32> to vector<16x512xf32>
    %104 = arith.mulf %103, %12 : vector<16x512xf32>
    %105 = arith.addf %101, %104 : vector<16x512xf32>
    %106 = vector.extract_strided_slice %54 {offsets = [0, 11], sizes = [16, 1], strides = [1, 1]} : vector<16x27xf32> to vector<16x1xf32>
    %107 = vector.broadcast %106 : vector<16x1xf32> to vector<16x512xf32>
    %108 = arith.mulf %107, %53 : vector<16x512xf32>
    %109 = arith.addf %105, %108 : vector<16x512xf32>
    %c8_i32_16 = arith.constant 8 : i32
    %110 = tpu.dynamic_rotate %109 by %c8_i32_16 dim 1 : vector<16x512xf32>, i32 -> vector<16x512xf32>
    %111 = vector.broadcast %35 : vector<1x512xf32> to vector<16x512xf32>
    %112 = arith.mulf %110, %111 : vector<16x512xf32>
    %113 = vector.extract_strided_slice %54 {offsets = [0, 12], sizes = [16, 1], strides = [1, 1]} : vector<16x27xf32> to vector<16x1xf32>
    %114 = vector.broadcast %113 : vector<16x1xf32> to vector<16x512xf32>
    %115 = arith.mulf %114, %50 : vector<16x512xf32>
    %116 = vector.extract_strided_slice %54 {offsets = [0, 13], sizes = [16, 1], strides = [1, 1]} : vector<16x27xf32> to vector<16x1xf32>
    %117 = vector.broadcast %116 : vector<16x1xf32> to vector<16x512xf32>
    %118 = arith.mulf %117, %12 : vector<16x512xf32>
    %119 = arith.addf %115, %118 : vector<16x512xf32>
    %120 = vector.extract_strided_slice %54 {offsets = [0, 14], sizes = [16, 1], strides = [1, 1]} : vector<16x27xf32> to vector<16x1xf32>
    %121 = vector.broadcast %120 : vector<16x1xf32> to vector<16x512xf32>
    %122 = arith.mulf %121, %53 : vector<16x512xf32>
    %123 = arith.addf %119, %122 : vector<16x512xf32>
    %124 = arith.addf %112, %123 : vector<16x512xf32>
    %125 = vector.extract_strided_slice %54 {offsets = [0, 15], sizes = [16, 1], strides = [1, 1]} : vector<16x27xf32> to vector<16x1xf32>
    %126 = vector.broadcast %125 : vector<16x1xf32> to vector<16x512xf32>
    %127 = arith.mulf %126, %50 : vector<16x512xf32>
    %128 = vector.extract_strided_slice %54 {offsets = [0, 16], sizes = [16, 1], strides = [1, 1]} : vector<16x27xf32> to vector<16x1xf32>
    %129 = vector.broadcast %128 : vector<16x1xf32> to vector<16x512xf32>
    %130 = arith.mulf %129, %12 : vector<16x512xf32>
    %131 = arith.addf %127, %130 : vector<16x512xf32>
    %132 = vector.extract_strided_slice %54 {offsets = [0, 17], sizes = [16, 1], strides = [1, 1]} : vector<16x27xf32> to vector<16x1xf32>
    %133 = vector.broadcast %132 : vector<16x1xf32> to vector<16x512xf32>
    %134 = arith.mulf %133, %53 : vector<16x512xf32>
    %135 = arith.addf %131, %134 : vector<16x512xf32>
    %c504_i32_17 = arith.constant 504 : i32
    %136 = tpu.dynamic_rotate %135 by %c504_i32_17 dim 1 : vector<16x512xf32>, i32 -> vector<16x512xf32>
    %137 = vector.broadcast %39 : vector<1x512xf32> to vector<16x512xf32>
    %138 = arith.mulf %136, %137 : vector<16x512xf32>
    %139 = arith.addf %124, %138 : vector<16x512xf32>
    %140 = arith.addf %98, %139 : vector<16x512xf32>
    %141 = vector.extract_strided_slice %54 {offsets = [0, 18], sizes = [16, 1], strides = [1, 1]} : vector<16x27xf32> to vector<16x1xf32>
    %142 = vector.broadcast %141 : vector<16x1xf32> to vector<16x512xf32>
    %143 = arith.mulf %142, %50 : vector<16x512xf32>
    %144 = vector.extract_strided_slice %54 {offsets = [0, 19], sizes = [16, 1], strides = [1, 1]} : vector<16x27xf32> to vector<16x1xf32>
    %145 = vector.broadcast %144 : vector<16x1xf32> to vector<16x512xf32>
    %146 = arith.mulf %145, %12 : vector<16x512xf32>
    %147 = arith.addf %143, %146 : vector<16x512xf32>
    %148 = vector.extract_strided_slice %54 {offsets = [0, 20], sizes = [16, 1], strides = [1, 1]} : vector<16x27xf32> to vector<16x1xf32>
    %149 = vector.broadcast %148 : vector<16x1xf32> to vector<16x512xf32>
    %150 = arith.mulf %149, %53 : vector<16x512xf32>
    %151 = arith.addf %147, %150 : vector<16x512xf32>
    %c8_i32_18 = arith.constant 8 : i32
    %152 = tpu.dynamic_rotate %151 by %c8_i32_18 dim 1 : vector<16x512xf32>, i32 -> vector<16x512xf32>
    %153 = vector.broadcast %35 : vector<1x512xf32> to vector<16x512xf32>
    %154 = arith.mulf %152, %153 : vector<16x512xf32>
    %155 = vector.extract_strided_slice %54 {offsets = [0, 21], sizes = [16, 1], strides = [1, 1]} : vector<16x27xf32> to vector<16x1xf32>
    %156 = vector.broadcast %155 : vector<16x1xf32> to vector<16x512xf32>
    %157 = arith.mulf %156, %50 : vector<16x512xf32>
    %158 = vector.extract_strided_slice %54 {offsets = [0, 22], sizes = [16, 1], strides = [1, 1]} : vector<16x27xf32> to vector<16x1xf32>
    %159 = vector.broadcast %158 : vector<16x1xf32> to vector<16x512xf32>
    %160 = arith.mulf %159, %12 : vector<16x512xf32>
    %161 = arith.addf %157, %160 : vector<16x512xf32>
    %162 = vector.extract_strided_slice %54 {offsets = [0, 23], sizes = [16, 1], strides = [1, 1]} : vector<16x27xf32> to vector<16x1xf32>
    %163 = vector.broadcast %162 : vector<16x1xf32> to vector<16x512xf32>
    %164 = arith.mulf %163, %53 : vector<16x512xf32>
    %165 = arith.addf %161, %164 : vector<16x512xf32>
    %166 = arith.addf %154, %165 : vector<16x512xf32>
    %167 = vector.extract_strided_slice %54 {offsets = [0, 24], sizes = [16, 1], strides = [1, 1]} : vector<16x27xf32> to vector<16x1xf32>
    %168 = vector.broadcast %167 : vector<16x1xf32> to vector<16x512xf32>
    %169 = arith.mulf %168, %50 : vector<16x512xf32>
    %170 = vector.extract_strided_slice %54 {offsets = [0, 25], sizes = [16, 1], strides = [1, 1]} : vector<16x27xf32> to vector<16x1xf32>
    %171 = vector.broadcast %170 : vector<16x1xf32> to vector<16x512xf32>
    %172 = arith.mulf %171, %12 : vector<16x512xf32>
    %173 = arith.addf %169, %172 : vector<16x512xf32>
    %174 = vector.extract_strided_slice %54 {offsets = [0, 26], sizes = [16, 1], strides = [1, 1]} : vector<16x27xf32> to vector<16x1xf32>
    %175 = vector.broadcast %174 : vector<16x1xf32> to vector<16x512xf32>
    %176 = arith.mulf %175, %53 : vector<16x512xf32>
    %177 = arith.addf %173, %176 : vector<16x512xf32>
    %c504_i32_19 = arith.constant 504 : i32
    %178 = tpu.dynamic_rotate %177 by %c504_i32_19 dim 1 : vector<16x512xf32>, i32 -> vector<16x512xf32>
    %179 = vector.broadcast %39 : vector<1x512xf32> to vector<16x512xf32>
    %180 = arith.mulf %178, %179 : vector<16x512xf32>
    %181 = arith.addf %166, %180 : vector<16x512xf32>
    %c448_i32 = arith.constant 448 : i32
    %182 = tpu.dynamic_rotate %181 by %c448_i32 dim 1 : vector<16x512xf32>, i32 -> vector<16x512xf32>
    %183 = vector.broadcast %47 : vector<1x512xf32> to vector<16x512xf32>
    %184 = arith.mulf %182, %183 : vector<16x512xf32>
    %185 = arith.addf %140, %184 : vector<16x512xf32>
    %186 = arith.negf %185 : vector<16x512xf32>
    %187 = math.exp %186 : vector<16x512xf32>
    %cst_20 = arith.constant 1.000000e+00 : f32
    %188 = vector.broadcast %cst_20 : f32 to vector<16x512xf32>
    %189 = arith.addf %188, %187 : vector<16x512xf32>
    %190 = arith.divf %188, %189 : vector<16x512xf32>
    %191 = arith.mulf %185, %190 : vector<16x512xf32>
    %192 = vector.extract_strided_slice %191 {offsets = [0, 0], sizes = [16, 256], strides = [1, 1]} : vector<16x512xf32> to vector<16x256xf32>
    %cst_21 = arith.constant dense<0.000000e+00> : vector<16xf32>
    %193 = vector.multi_reduction <add>, %192, %cst_21 [1] : vector<16x256xf32> to vector<16xf32>
    %194 = vector.shape_cast %193 : vector<16xf32> to vector<16x1xf32>
    %cst_22 = arith.constant 2.560000e+02 : f32
    %195 = vector.broadcast %cst_22 : f32 to vector<16x1xf32>
    %196 = arith.divf %194, %195 : vector<16x1xf32>
    %197 = vector.extract_strided_slice %191 {offsets = [0, 256], sizes = [16, 256], strides = [1, 1]} : vector<16x512xf32> to vector<16x256xf32>
    %cst_23 = arith.constant dense<0.000000e+00> : vector<16xf32>
    %198 = vector.multi_reduction <add>, %197, %cst_23 [1] : vector<16x256xf32> to vector<16xf32>
    %199 = vector.shape_cast %198 : vector<16xf32> to vector<16x1xf32>
    %cst_24 = arith.constant 2.560000e+02 : f32
    %200 = vector.broadcast %cst_24 : f32 to vector<16x1xf32>
    %201 = arith.divf %199, %200 : vector<16x1xf32>
    %202 = tpu.concatenate %196, %201 in 1 : vector<16x1xf32>, vector<16x1xf32> -> vector<16x2xf32>
    %c0_25 = arith.constant 0 : index
    %c0_26 = arith.constant 0 : index
    %203 = vector.load %arg4[%c0_25, %c0_26] : memref<8x16xf32, #tpu.memory_space<vmem>>, vector<8x16xf32>
    %cst_27 = arith.constant dense<0.000000e+00> : vector<8x2xf32>
    %204 = tpu.matmul %203, %202, %cst_27 {dimension_numbers = #tpu.dot_dimension_numbers<[1], [0], [0], [1], [0, 0, 1, 1], [], []>} : vector<8x16xf32>, vector<16x2xf32>, vector<8x2xf32> -> vector<8x2xf32>
    %c0_28 = arith.constant 0 : index
    %c0_29 = arith.constant 0 : index
    %205 = vector.load %arg5[%c0_28, %c0_29] : memref<8x1xf32, #tpu.memory_space<vmem>>, vector<8x1xf32>
    %206 = vector.broadcast %205 : vector<8x1xf32> to vector<8x2xf32>
    %207 = arith.addf %204, %206 : vector<8x2xf32>
    %208 = arith.negf %207 : vector<8x2xf32>
    %209 = math.exp %208 : vector<8x2xf32>
    %cst_30 = arith.constant 1.000000e+00 : f32
    %210 = vector.broadcast %cst_30 : f32 to vector<8x2xf32>
    %211 = arith.addf %210, %209 : vector<8x2xf32>
    %212 = arith.divf %210, %211 : vector<8x2xf32>
    %213 = arith.mulf %207, %212 : vector<8x2xf32>
    %c0_31 = arith.constant 0 : index
    %c0_32 = arith.constant 0 : index
    %214 = vector.load %arg6[%c0_31, %c0_32] : memref<16x8xf32, #tpu.memory_space<vmem>>, vector<16x8xf32>
    %cst_33 = arith.constant dense<0.000000e+00> : vector<16x2xf32>
    %215 = tpu.matmul %214, %213, %cst_33 {dimension_numbers = #tpu.dot_dimension_numbers<[1], [0], [0], [1], [0, 0, 1, 1], [], []>} : vector<16x8xf32>, vector<8x2xf32>, vector<16x2xf32> -> vector<16x2xf32>
    %c0_34 = arith.constant 0 : index
    %c0_35 = arith.constant 0 : index
    %216 = vector.load %arg7[%c0_34, %c0_35] : memref<16x1xf32, #tpu.memory_space<vmem>>, vector<16x1xf32>
    %217 = vector.broadcast %216 : vector<16x1xf32> to vector<16x2xf32>
    %218 = arith.addf %215, %217 : vector<16x2xf32>
    %219 = arith.negf %218 : vector<16x2xf32>
    %220 = math.exp %219 : vector<16x2xf32>
    %cst_36 = arith.constant 1.000000e+00 : f32
    %221 = vector.broadcast %cst_36 : f32 to vector<16x2xf32>
    %222 = arith.addf %221, %220 : vector<16x2xf32>
    %223 = arith.divf %221, %222 : vector<16x2xf32>
    %c0_37 = arith.constant 0 : index
    %224 = memref.load %arg9[%c0_37] : memref<1xf32, #tpu.memory_space<smem>>
    %225 = vector.extract_strided_slice %191 {offsets = [0, 0], sizes = [16, 256], strides = [1, 1]} : vector<16x512xf32> to vector<16x256xf32>
    %226 = vector.extract_strided_slice %223 {offsets = [0, 0], sizes = [16, 1], strides = [1, 1]} : vector<16x2xf32> to vector<16x1xf32>
    %227 = vector.broadcast %226 : vector<16x1xf32> to vector<16x256xf32>
    %228 = arith.mulf %225, %227 : vector<16x256xf32>
    %c0_38 = arith.constant 0 : index
    %c0_39 = arith.constant 0 : index
    %229 = vector.load %arg8[%c0_38, %c0_39] : memref<8x16xf32, #tpu.memory_space<vmem>>, vector<8x16xf32>
    %cst_40 = arith.constant dense<0.000000e+00> : vector<8x256xf32>
    %230 = tpu.matmul %229, %228, %cst_40 {dimension_numbers = #tpu.dot_dimension_numbers<[1], [0], [0], [1], [0, 0, 1, 1], [], []>} : vector<8x16xf32>, vector<16x256xf32>, vector<8x256xf32> -> vector<8x256xf32>
    %c0_41 = arith.constant 0 : index
    %c0_42 = arith.constant 0 : index
    %c0_43 = arith.constant 0 : index
    %231 = vector.load %arg1[%c0_41, %c0_42, %c0_43] : memref<2x8x256xf32, #tpu.memory_space<vmem>>, vector<1x8x256xf32>
    %232 = vector.shape_cast %231 : vector<1x8x256xf32> to vector<8x256xf32>
    %233 = vector.broadcast %224 : f32 to vector<8x256xf32>
    %234 = arith.mulf %233, %230 : vector<8x256xf32>
    %235 = arith.addf %232, %234 : vector<8x256xf32>
    %c0_44 = arith.constant 0 : index
    %c0_45 = arith.constant 0 : index
    %c0_46 = arith.constant 0 : index
    %236 = vector.load %arg10[%c0_44, %c0_45, %c0_46] : memref<2x8x256xf32, #tpu.memory_space<vmem>>, vector<1x8x256xf32>
    %237 = vector.shape_cast %236 : vector<1x8x256xf32> to vector<8x256xf32>
    %238 = vector.shape_cast %235 : vector<8x256xf32> to vector<1x8x256xf32>
    tpu.vector_store %arg10[%c0_44, %c0_45, %c0_46], %238 {strides = array<i32>} : memref<2x8x256xf32, #tpu.memory_space<vmem>>, vector<1x8x256xf32>,
    %239 = vector.extract_strided_slice %191 {offsets = [0, 256], sizes = [16, 256], strides = [1, 1]} : vector<16x512xf32> to vector<16x256xf32>
    %240 = vector.extract_strided_slice %223 {offsets = [0, 1], sizes = [16, 1], strides = [1, 1]} : vector<16x2xf32> to vector<16x1xf32>
    %241 = vector.broadcast %240 : vector<16x1xf32> to vector<16x256xf32>
    %242 = arith.mulf %239, %241 : vector<16x256xf32>
    %c0_47 = arith.constant 0 : index
    %c0_48 = arith.constant 0 : index
    %243 = vector.load %arg8[%c0_47, %c0_48] : memref<8x16xf32, #tpu.memory_space<vmem>>, vector<8x16xf32>
    %cst_49 = arith.constant dense<0.000000e+00> : vector<8x256xf32>
    %244 = tpu.matmul %243, %242, %cst_49 {dimension_numbers = #tpu.dot_dimension_numbers<[1], [0], [0], [1], [0, 0, 1, 1], [], []>} : vector<8x16xf32>, vector<16x256xf32>, vector<8x256xf32> -> vector<8x256xf32>
    %c1_50 = arith.constant 1 : index
    %c0_51 = arith.constant 0 : index
    %c0_52 = arith.constant 0 : index
    %245 = vector.load %arg1[%c1_50, %c0_51, %c0_52] : memref<2x8x256xf32, #tpu.memory_space<vmem>>, vector<1x8x256xf32>
    %246 = vector.shape_cast %245 : vector<1x8x256xf32> to vector<8x256xf32>
    %247 = vector.broadcast %224 : f32 to vector<8x256xf32>
    %248 = arith.mulf %247, %244 : vector<8x256xf32>
    %249 = arith.addf %246, %248 : vector<8x256xf32>
    %c1_53 = arith.constant 1 : index
    %c0_54 = arith.constant 0 : index
    %c0_55 = arith.constant 0 : index
    %250 = vector.load %arg10[%c1_53, %c0_54, %c0_55] : memref<2x8x256xf32, #tpu.memory_space<vmem>>, vector<1x8x256xf32>
    %251 = vector.shape_cast %250 : vector<1x8x256xf32> to vector<8x256xf32>
    %252 = vector.shape_cast %249 : vector<8x256xf32> to vector<1x8x256xf32>
    tpu.vector_store %arg10[%c1_53, %c0_54, %c0_55], %252 {strides = array<i32>} : memref<2x8x256xf32, #tpu.memory_space<vmem>>, vector<1x8x256xf32>,
    return
  }
  func.func @transform_0(%arg0: i32) -> (i32, i32, i32) {
    %c0_i32 = arith.constant 0 : i32
    %c0_i32_0 = arith.constant 0 : i32
    %c0_i32_1 = arith.constant 0 : i32
    return %arg0, %c0_i32, %c0_i32_0 : i32, i32, i32
  }
  func.func @transform_1(%arg0: i32) -> (i32, i32) {
    %c0_i32 = arith.constant 0 : i32
    %c0_i32_0 = arith.constant 0 : i32
    %c0_i32_1 = arith.constant 0 : i32
    return %c0_i32, %c0_i32_0 : i32, i32
  }
  func.func @transform_2(%arg0: i32) -> (i32, i32) {
    %c0_i32 = arith.constant 0 : i32
    %c0_i32_0 = arith.constant 0 : i32
    %c0_i32_1 = arith.constant 0 : i32
    return %c0_i32, %c0_i32_0 : i32, i32
  }
  func.func @transform_3(%arg0: i32) -> (i32, i32) {
    %c0_i32 = arith.constant 0 : i32
    %c0_i32_0 = arith.constant 0 : i32
    %c0_i32_1 = arith.constant 0 : i32
    return %c0_i32, %c0_i32_0 : i32, i32
  }
  func.func @transform_4(%arg0: i32) -> (i32, i32) {
    %c0_i32 = arith.constant 0 : i32
    %c0_i32_0 = arith.constant 0 : i32
    %c0_i32_1 = arith.constant 0 : i32
    return %c0_i32, %c0_i32_0 : i32, i32
  }
  func.func @transform_5(%arg0: i32) -> (i32, i32) {
    %c0_i32 = arith.constant 0 : i32
    %c0_i32_0 = arith.constant 0 : i32
    %c0_i32_1 = arith.constant 0 : i32
    return %c0_i32, %c0_i32_0 : i32, i32
  }
  func.func @transform_6(%arg0: i32) -> (i32, i32) {
    %c0_i32 = arith.constant 0 : i32
    %c0_i32_0 = arith.constant 0 : i32
    %c0_i32_1 = arith.constant 0 : i32
    return %c0_i32, %c0_i32_0 : i32, i32
  }
  func.func @transform_7(%arg0: i32) -> (i32, i32) {
    %c0_i32 = arith.constant 0 : i32
    %c0_i32_0 = arith.constant 0 : i32
    %c0_i32_1 = arith.constant 0 : i32
    return %c0_i32, %c0_i32_0 : i32, i32
  }
  func.func @transform_8(%arg0: i32) -> i32 {
    %c0_i32 = arith.constant 0 : i32
    %c0_i32_0 = arith.constant 0 : i32
    return %c0_i32 : i32
  }
  func.func @transform_9(%arg0: i32) -> (i32, i32, i32) {
    %c0_i32 = arith.constant 0 : i32
    %c0_i32_0 = arith.constant 0 : i32
    %c0_i32_1 = arith.constant 0 : i32
    return %arg0, %c0_i32, %c0_i32_0 : i32, i32, i32
  }
}

</mosaic_0001>

<llo_original>
// kernel: basic_bneck.1
$region0: #{basic_bneck.1}
  #allocation0 [shape = 'u32[]', space=smem, size = 0x4, offset = 0x4, fixed_abs, tag = 'smem constant byte address 0x4 - core index']
  #allocation1 [shape = 'u32[72,128]{1,0:T(1,128)}', space=vmem, size = 0x9000, scoped, tag = 'internal scratch']
  #allocation2 [shape = 'f32[1]{0:T(128)S(6)}', space=smem, size = 0x200, scoped, tag = 'scoped memory for basic_bneck.1']
  %s0 = inlined_call_operand.vmem [shape: f32[2,8,256], index: 0, kind: input, shape index: {}]
  %s1 = inlined_call_operand.vmem [shape: f32[16,8], index: 1, kind: input, shape index: {}]
  %s2 = inlined_call_operand.vmem [shape: f32[16,27], index: 2, kind: input, shape index: {}]
  %s3 = inlined_call_operand.vmem [shape: f32[8,16], index: 3, kind: input, shape index: {}]
  %s4 = inlined_call_operand.vmem [shape: f32[8,1], index: 4, kind: input, shape index: {}]
  %s5 = inlined_call_operand.vmem [shape: f32[16,8], index: 5, kind: input, shape index: {}]
  %s6 = inlined_call_operand.vmem [shape: f32[16,1], index: 6, kind: input, shape index: {}]
  %s7 = inlined_call_operand.vmem [shape: f32[8,16], index: 7, kind: input, shape index: {}]
  %s8 = inlined_call_operand.<no memory space> [shape: f32[1], index: 8, kind: input, shape index: {}]
  %s9 = inlined_call_operand.vmem [shape: f32[2,8,256], index: 9, kind: output, shape index: {}]
  %s10 = sld [smem:[#allocation0]]
  $region46: #{basic_bneck.1} parent=0
    _
  %s12 = ssub.s32 1, %s10
  %s13 = scalar_select 0, %s12, %s10
  %14 = sst [smem:[#allocation2]] %s8
  // Predicated region
  $region2: #{basic_bneck.1} parent=0 // pred_check
    _
  $region3: #{basic_bneck.1} parent=0 // pred_check_branch
    %16 = sbr.rel (0) target = $region5
  $region4: #{basic_bneck.1} parent=0 // pred_region
    _
  $region5: #{basic_bneck.1} parent=0 // pred_fallthru
    _
  // Predicated region
  $region6: #{basic_bneck.1} parent=0 // pred_check
    _
  $region7: #{basic_bneck.1} parent=0 // pred_check_branch
    %18 = sbr.rel (0) target = $region9
  $region8: #{basic_bneck.1} parent=0 // pred_region
    _
  $region9: #{basic_bneck.1} parent=0 // pred_fallthru
    _
  // Predicated region
  $region10: #{basic_bneck.1} parent=0 // pred_check
    _
  $region11: #{basic_bneck.1} parent=0 // pred_check_branch
    %20 = sbr.rel (0) target = $region13
  $region12: #{basic_bneck.1} parent=0 // pred_region
    _
  $region13: #{basic_bneck.1} parent=0 // pred_fallthru
    _
  // Predicated region
  $region14: #{basic_bneck.1} parent=0 // pred_check
    _
  $region15: #{basic_bneck.1} parent=0 // pred_check_branch
    %22 = sbr.rel (0) target = $region17
  $region16: #{basic_bneck.1} parent=0 // pred_region
    _
  $region17: #{basic_bneck.1} parent=0 // pred_fallthru
    _
  // Predicated region
  $region18: #{basic_bneck.1} parent=0 // pred_check
    _
  $region19: #{basic_bneck.1} parent=0 // pred_check_branch
    %24 = sbr.rel (0) target = $region21
  $region20: #{basic_bneck.1} parent=0 // pred_region
    _
  $region21: #{basic_bneck.1} parent=0 // pred_fallthru
    _
  // Predicated region
  $region22: #{basic_bneck.1} parent=0 // pred_check
    _
  $region23: #{basic_bneck.1} parent=0 // pred_check_branch
    %26 = sbr.rel (0) target = $region25
  $region24: #{basic_bneck.1} parent=0 // pred_region
    _
  $region25: #{basic_bneck.1} parent=0 // pred_fallthru
    _
  // Predicated region
  $region26: #{basic_bneck.1} parent=0 // pred_check
    _
  $region27: #{basic_bneck.1} parent=0 // pred_check_branch
    %28 = sbr.rel (0) target = $region29
  $region28: #{basic_bneck.1} parent=0 // pred_region
    _
  $region29: #{basic_bneck.1} parent=0 // pred_fallthru
    _
  // Predicated region
  $region30: #{basic_bneck.1} parent=0 // pred_check
    _
  $region31: #{basic_bneck.1} parent=0 // pred_check_branch
    %30 = sbr.rel (0) target = $region33
  $region32: #{basic_bneck.1} parent=0 // pred_region
    _
  $region33: #{basic_bneck.1} parent=0 // pred_fallthru
    _
  // Predicated region
  $region34: #{basic_bneck.1} parent=0 // pred_check
    _
  $region35: #{basic_bneck.1} parent=0 // pred_check_branch
    %32 = sbr.rel (0) target = $region37
  $region36: #{basic_bneck.1} parent=0 // pred_region
    _
  $region37: #{basic_bneck.1} parent=0 // pred_fallthru
    _
  %v33 = vld [vmem:[%s0] sm:$0xff]
  %v34 = vld [vmem:[%s0 + $0x8] sm:$0xff]
  %s35 = scalar_lea.vmem %s0, 16
  %v36 = vld [vmem:[%s35] sm:$0xff]
  %v37 = vld [vmem:[%s35 + $0x8] sm:$0xff]
  %v38 = vld [vmem:[%s1] sm:$0xff]
  %v39 = vld [vmem:[%s1 + $0x8] sm:$0xff]
  %vm40 = vcmask 64512
  %v42 = vsel %vm40, %v38, 0
  %v45 = vsel %vm40, %v39, 0
  %47 = vmatpush.msra.mxu0 0.0
  %48 = vmatpush.msra.mxu0 0.0
  %49 = vmatpush.msra.mxu0 0.0
  %50 = vmatpush.msra.mxu0 0.0
  %51 = vmatpush.msra.mxu0 0.0
  %52 = vmatpush.msra.mxu0 0.0
  %53 = vmatpush.msra.mxu0 0.0
  %54 = vmatpush.msra.mxu0 0.0
  %55 = vmatpush.msra.mxu0 0.0
  %56 = vmatpush.msra.mxu0 0.0
  %57 = vmatpush.msra.mxu0 0.0
  %58 = vmatpush.msra.mxu0 0.0
  %59 = vmatpush.msra.mxu0 0.0
  %60 = vmatpush.msra.mxu0 0.0
  %61 = vmatpush.msra.mxu0 0.0
  %62 = vmatpush.msra.mxu0 %v33
  %63 = vmatmul.f32.gmra.mxu0 %v42
  %v64 = vpop.f32.mrf.mxu0
  %v65 = vadd.f32 0.0, %v64
  %66 = vmatmul.f32.gmra.mxu0 %v45
  %v67 = vpop.f32.mrf.mxu0
  %v68 = vadd.f32 0.0, %v67
  %69 = vdwg.mxu0
  %70 = vmatpush.msra.mxu0 0.0
  %71 = vmatpush.msra.mxu0 0.0
  %72 = vmatpush.msra.mxu0 0.0
  %73 = vmatpush.msra.mxu0 0.0
  %74 = vmatpush.msra.mxu0 0.0
  %75 = vmatpush.msra.mxu0 0.0
  %76 = vmatpush.msra.mxu0 0.0
  %77 = vmatpush.msra.mxu0 0.0
  %78 = vmatpush.msra.mxu0 0.0
  %79 = vmatpush.msra.mxu0 0.0
  %80 = vmatpush.msra.mxu0 0.0
  %81 = vmatpush.msra.mxu0 0.0
  %82 = vmatpush.msra.mxu0 0.0
  %83 = vmatpush.msra.mxu0 0.0
  %84 = vmatpush.msra.mxu0 0.0
  %85 = vmatpush.msra.mxu0 %v34
  %86 = vmatmul.f32.gmra.mxu0 %v42
  %v87 = vpop.f32.mrf.mxu0
  %v88 = vadd.f32 0.0, %v87
  %89 = vmatmul.f32.gmra.mxu0 %v45
  %v90 = vpop.f32.mrf.mxu0
  %v91 = vadd.f32 0.0, %v90
  %92 = vdwg.mxu0
  %93 = vmatpush.msra.mxu0 0.0
  %94 = vmatpush.msra.mxu0 0.0
  %95 = vmatpush.msra.mxu0 0.0
  %96 = vmatpush.msra.mxu0 0.0
  %97 = vmatpush.msra.mxu0 0.0
  %98 = vmatpush.msra.mxu0 0.0
  %99 = vmatpush.msra.mxu0 0.0
  %100 = vmatpush.msra.mxu0 0.0
  %101 = vmatpush.msra.mxu0 0.0
  %102 = vmatpush.msra.mxu0 0.0
  %103 = vmatpush.msra.mxu0 0.0
  %104 = vmatpush.msra.mxu0 0.0
  %105 = vmatpush.msra.mxu0 0.0
  %106 = vmatpush.msra.mxu0 0.0
  %107 = vmatpush.msra.mxu0 0.0
  %108 = vmatpush.msra.mxu0 %v36
  %109 = vmatmul.f32.gmra.mxu0 %v42
  %v110 = vpop.f32.mrf.mxu0
  %v111 = vadd.f32 0.0, %v110
  %112 = vmatmul.f32.gmra.mxu0 %v45
  %v113 = vpop.f32.mrf.mxu0
  %v114 = vadd.f32 0.0, %v113
  %115 = vdwg.mxu0
  %116 = vmatpush.msra.mxu0 0.0
  %117 = vmatpush.msra.mxu0 0.0
  %118 = vmatpush.msra.mxu0 0.0
  %119 = vmatpush.msra.mxu0 0.0
  %120 = vmatpush.msra.mxu0 0.0
  %121 = vmatpush.msra.mxu0 0.0
  %122 = vmatpush.msra.mxu0 0.0
  %123 = vmatpush.msra.mxu0 0.0
  %124 = vmatpush.msra.mxu0 0.0
  %125 = vmatpush.msra.mxu0 0.0
  %126 = vmatpush.msra.mxu0 0.0
  %127 = vmatpush.msra.mxu0 0.0
  %128 = vmatpush.msra.mxu0 0.0
  %129 = vmatpush.msra.mxu0 0.0
  %130 = vmatpush.msra.mxu0 0.0
  %131 = vmatpush.msra.mxu0 %v37
  %132 = vmatmul.f32.gmra.mxu0 %v42
  %v133 = vpop.f32.mrf.mxu0
  %v134 = vadd.f32 0.0, %v133
  %135 = vmatmul.f32.gmra.mxu0 %v45
  %v136 = vpop.f32.mrf.mxu0
  %v137 = vadd.f32 0.0, %v136
  %138 = vdwg.mxu0
  %v139 = vxor.u32 %v65, 2147483648
  %v140 = vxor.u32 %v88, 2147483648
  %v141 = vxor.u32 %v111, 2147483648
  %v142 = vxor.u32 %v134, 2147483648
  %v143 = vxor.u32 %v68, 2147483648
  %v144 = vxor.u32 %v91, 2147483648
  %v145 = vxor.u32 %v114, 2147483648
  %v146 = vxor.u32 %v137, 2147483648
  %v147 = vmul.f32 %v139, 1.442695
  %v148 = vpow.pop %v147
  %v149 = vmul.f32 %v140, 1.442695
  %v150 = vpow.pop %v149
  %v151 = vmul.f32 %v141, 1.442695
  %v152 = vpow.pop %v151
  %v153 = vmul.f32 %v142, 1.442695
  %v154 = vpow.pop %v153
  %v155 = vmul.f32 %v143, 1.442695
  %v156 = vpow.pop %v155
  %v157 = vmul.f32 %v144, 1.442695
  %v158 = vpow.pop %v157
  %v159 = vmul.f32 %v145, 1.442695
  %v160 = vpow.pop %v159
  %v161 = vmul.f32 %v146, 1.442695
  %v162 = vpow.pop %v161
  %v163 = vadd.f32 %v148, 1.0
  %v164 = vadd.f32 %v150, 1.0
  %v165 = vadd.f32 %v152, 1.0
  %v166 = vadd.f32 %v154, 1.0
  %v167 = vadd.f32 %v156, 1.0
  %v168 = vadd.f32 %v158, 1.0
  %v169 = vadd.f32 %v160, 1.0
  %v170 = vadd.f32 %v162, 1.0
  %v171 = vrcp.pop %v163
  %v172 = vmul.f32 %v163, %v171
  %v173 = vsub.f32 1.0, %v172
  %v174 = vmul.f32 %v171, %v173
  %v175 = vadd.f32 %v171, %v174
  %vm176 = vweird.f32 %v163
  %vm177 = vweird.f32 %v171
  %vm178 = vmor %vm176, %vm177
  %v179 = vsel %vm178, %v171, %v175
  %v180 = vand.u32 2147483647, %v163
  %vm181 = vcmp.eq.f32.partialorder %v180, 8.507059e+37
  %v182 = vand.u32 %v163, 2147483648
  %v183 = vor.u32 1.1754944e-38, %v182
  %v184 = vsel %vm181, %v183, %v179
  %v185 = vmul.f32 1.0, %v184
  %v186 = vrcp.pop %v164
  %v187 = vmul.f32 %v164, %v186
  %v188 = vsub.f32 1.0, %v187
  %v189 = vmul.f32 %v186, %v188
  %v190 = vadd.f32 %v186, %v189
  %vm191 = vweird.f32 %v164
  %vm192 = vweird.f32 %v186
  %vm193 = vmor %vm191, %vm192
  %v194 = vsel %vm193, %v186, %v190
  %v195 = vand.u32 2147483647, %v164
  %vm196 = vcmp.eq.f32.partialorder %v195, 8.507059e+37
  %v197 = vand.u32 %v164, 2147483648
  %v198 = vor.u32 1.1754944e-38, %v197
  %v199 = vsel %vm196, %v198, %v194
  %v200 = vmul.f32 1.0, %v199
  %v201 = vrcp.pop %v165
  %v202 = vmul.f32 %v165, %v201
  %v203 = vsub.f32 1.0, %v202
  %v204 = vmul.f32 %v201, %v203
  %v205 = vadd.f32 %v201, %v204
  %vm206 = vweird.f32 %v165
  %vm207 = vweird.f32 %v201
  %vm208 = vmor %vm206, %vm207
  %v209 = vsel %vm208, %v201, %v205
  %v210 = vand.u32 2147483647, %v165
  %vm211 = vcmp.eq.f32.partialorder %v210, 8.507059e+37
  %v212 = vand.u32 %v165, 2147483648
  %v213 = vor.u32 1.1754944e-38, %v212
  %v214 = vsel %vm211, %v213, %v209
  %v215 = vmul.f32 1.0, %v214
  %v216 = vrcp.pop %v166
  %v217 = vmul.f32 %v166, %v216
  %v218 = vsub.f32 1.0, %v217
  %v219 = vmul.f32 %v216, %v218
  %v220 = vadd.f32 %v216, %v219
  %vm221 = vweird.f32 %v166
  %vm222 = vweird.f32 %v216
  %vm223 = vmor %vm221, %vm222
  %v224 = vsel %vm223, %v216, %v220
  %v225 = vand.u32 2147483647, %v166
  %vm226 = vcmp.eq.f32.partialorder %v225, 8.507059e+37
  %v227 = vand.u32 %v166, 2147483648
  %v228 = vor.u32 1.1754944e-38, %v227
  %v229 = vsel %vm226, %v228, %v224
  %v230 = vmul.f32 1.0, %v229
  %v231 = vrcp.pop %v167
  %v232 = vmul.f32 %v167, %v231
  %v233 = vsub.f32 1.0, %v232
  %v234 = vmul.f32 %v231, %v233
  %v235 = vadd.f32 %v231, %v234
  %vm236 = vweird.f32 %v167
  %vm237 = vweird.f32 %v231
  %vm238 = vmor %vm236, %vm237
  %v239 = vsel %vm238, %v231, %v235
  %v240 = vand.u32 2147483647, %v167
  %vm241 = vcmp.eq.f32.partialorder %v240, 8.507059e+37
  %v242 = vand.u32 %v167, 2147483648
  %v243 = vor.u32 1.1754944e-38, %v242
  %v244 = vsel %vm241, %v243, %v239
  %v245 = vmul.f32 1.0, %v244
  %v246 = vrcp.pop %v168
  %v247 = vmul.f32 %v168, %v246
  %v248 = vsub.f32 1.0, %v247
  %v249 = vmul.f32 %v246, %v248
  %v250 = vadd.f32 %v246, %v249
  %vm251 = vweird.f32 %v168
  %vm252 = vweird.f32 %v246
  %vm253 = vmor %vm251, %vm252
  %v254 = vsel %vm253, %v246, %v250
  %v255 = vand.u32 2147483647, %v168
  %vm256 = vcmp.eq.f32.partialorder %v255, 8.507059e+37
  %v257 = vand.u32 %v168, 2147483648
  %v258 = vor.u32 1.1754944e-38, %v257
  %v259 = vsel %vm256, %v258, %v254
  %v260 = vmul.f32 1.0, %v259
  %v261 = vrcp.pop %v169
  %v262 = vmul.f32 %v169, %v261
  %v263 = vsub.f32 1.0, %v262
  %v264 = vmul.f32 %v261, %v263
  %v265 = vadd.f32 %v261, %v264
  %vm266 = vweird.f32 %v169
  %vm267 = vweird.f32 %v261
  %vm268 = vmor %vm266, %vm267
  %v269 = vsel %vm268, %v261, %v265
  %v270 = vand.u32 2147483647, %v169
  %vm271 = vcmp.eq.f32.partialorder %v270, 8.507059e+37
  %v272 = vand.u32 %v169, 2147483648
  %v273 = vor.u32 1.1754944e-38, %v272
  %v274 = vsel %vm271, %v273, %v269
  %v275 = vmul.f32 1.0, %v274
  %v276 = vrcp.pop %v170
  %v277 = vmul.f32 %v170, %v276
  %v278 = vsub.f32 1.0, %v277
  %v279 = vmul.f32 %v276, %v278
  %v280 = vadd.f32 %v276, %v279
  %vm281 = vweird.f32 %v170
  %vm282 = vweird.f32 %v276
  %vm283 = vmor %vm281, %vm282
  %v284 = vsel %vm283, %v276, %v280
  %v285 = vand.u32 2147483647, %v170
  %vm286 = vcmp.eq.f32.partialorder %v285, 8.507059e+37
  %v287 = vand.u32 %v170, 2147483648
  %v288 = vor.u32 1.1754944e-38, %v287
  %v289 = vsel %vm286, %v288, %v284
  %v290 = vmul.f32 1.0, %v289
  %v291 = vmul.f32 %v65, %v185
  %v292 = vmul.f32 %v88, %v200
  %v293 = vmul.f32 %v111, %v215
  %v294 = vmul.f32 %v134, %v230
  %v295 = vmul.f32 %v68, %v245
  %v296 = vmul.f32 %v91, %v260
  %v297 = vmul.f32 %v114, %v275
  %v298 = vmul.f32 %v137, %v290
  %v299 = vlaneseq
  %v300 = vand.u32 %v299, 127
  %v301 = vadd.s32 %v300, 128
  %v302 = vadd.s32 %v300, 256
  %v303 = vadd.s32 %v300, 384
  %v304 = vshra.s32 %v300, 6
  %v305 = vshra.s32 %v301, 6
  %v306 = vshra.s32 %v302, 6
  %v307 = vshra.s32 %v303, 6
  %v308 = vand.u32 %v304, 3
  %v309 = vand.u32 %v305, 3
  %v310 = vand.u32 %v306, 3
  %v311 = vand.u32 %v307, 3
  %v312 = vshra.s32 %v300, 3
  %v313 = vshra.s32 %v301, 3
  %v314 = vshra.s32 %v302, 3
  %v315 = vshra.s32 %v303, 3
  %v316 = vand.u32 %v312, 7
  %v317 = vand.u32 %v313, 7
  %v318 = vand.u32 %v314, 7
  %v319 = vand.u32 %v315, 7
  %v320 = vand.u32 %v300, 7
  %v321 = vand.u32 %v301, 7
  %v322 = vand.u32 %v302, 7
  %v323 = vand.u32 %v303, 7
  %vm324 = vcmp.ge.s32.totalorder %v320, 1
  %vm325 = vcmp.ge.s32.totalorder %v321, 1
  %vm326 = vcmp.ge.s32.totalorder %v322, 1
  %vm327 = vcmp.ge.s32.totalorder %v323, 1
  %v328 = vsel %vm324, 1, 0
  %v329 = vsel %vm325, 1, 0
  %v330 = vsel %vm326, 1, 0
  %v331 = vsel %vm327, 1, 0
  %v332 = vcvt.s32.f32 %v328
  %v333 = vcvt.s32.f32 %v329
  %v334 = vcvt.s32.f32 %v330
  %v335 = vcvt.s32.f32 %v331
  %vm336 = vcmp.le.s32.totalorder %v320, 6
  %vm337 = vcmp.le.s32.totalorder %v321, 6
  %vm338 = vcmp.le.s32.totalorder %v322, 6
  %vm339 = vcmp.le.s32.totalorder %v323, 6
  %v340 = vsel %vm336, 1, 0
  %v341 = vsel %vm337, 1, 0
  %v342 = vsel %vm338, 1, 0
  %v343 = vsel %vm339, 1, 0
  %v344 = vcvt.s32.f32 %v340
  %v345 = vcvt.s32.f32 %v341
  %v346 = vcvt.s32.f32 %v342
  %v347 = vcvt.s32.f32 %v343
  %vm348 = vcmp.ge.s32.totalorder %v316, 1
  %vm349 = vcmp.ge.s32.totalorder %v317, 1
  %vm350 = vcmp.ge.s32.totalorder %v318, 1
  %vm351 = vcmp.ge.s32.totalorder %v319, 1
  %v352 = vsel %vm348, 1, 0
  %v353 = vsel %vm349, 1, 0
  %v354 = vsel %vm350, 1, 0
  %v355 = vsel %vm351, 1, 0
  %v356 = vcvt.s32.f32 %v352
  %v357 = vcvt.s32.f32 %v353
  %v358 = vcvt.s32.f32 %v354
  %v359 = vcvt.s32.f32 %v355
  %vm360 = vcmp.le.s32.totalorder %v316, 6
  %vm361 = vcmp.le.s32.totalorder %v317, 6
  %vm362 = vcmp.le.s32.totalorder %v318, 6
  %vm363 = vcmp.le.s32.totalorder %v319, 6
  %v364 = vsel %vm360, 1, 0
  %v365 = vsel %vm361, 1, 0
  %v366 = vsel %vm362, 1, 0
  %v367 = vsel %vm363, 1, 0
  %v368 = vcvt.s32.f32 %v364
  %v369 = vcvt.s32.f32 %v365
  %v370 = vcvt.s32.f32 %v366
  %v371 = vcvt.s32.f32 %v367
  %vm372 = vcmp.ge.s32.totalorder %v308, 1
  %vm373 = vcmp.ge.s32.totalorder %v309, 1
  %vm374 = vcmp.ge.s32.totalorder %v310, 1
  %vm375 = vcmp.ge.s32.totalorder %v311, 1
  %v376 = vsel %vm372, 1, 0
  %v377 = vsel %vm373, 1, 0
  %v378 = vsel %vm374, 1, 0
  %v379 = vsel %vm375, 1, 0
  %v380 = vcvt.s32.f32 %v376
  %v381 = vcvt.s32.f32 %v377
  %v382 = vcvt.s32.f32 %v378
  %v383 = vcvt.s32.f32 %v379
  %vm384 = vcmp.le.s32.totalorder %v308, 2
  %vm385 = vcmp.le.s32.totalorder %v309, 2
  %vm386 = vcmp.le.s32.totalorder %v310, 2
  %vm387 = vcmp.le.s32.totalorder %v311, 2
  %v388 = vsel %vm384, 1, 0
  %v389 = vsel %vm385, 1, 0
  %v390 = vsel %vm386, 1, 0
  %v391 = vsel %vm387, 1, 0
  %v392 = vcvt.s32.f32 %v388
  %v393 = vcvt.s32.f32 %v389
  %v394 = vcvt.s32.f32 %v390
  %v395 = vcvt.s32.f32 %v391
  %396 = vrot.lane.b32.xlu0 %v291, 1
  %v397 = vpop.permute.xlu0 %396
  %398 = vrot.lane.b32.xlu0 %v295, 1
  %v399 = vpop.permute.xlu0 %398
  %400 = vrot.lane.b32.xlu0 %v292, 1
  %v401 = vpop.permute.xlu0 %400
  %402 = vrot.lane.b32.xlu0 %v296, 1
  %v403 = vpop.permute.xlu0 %402
  %404 = vrot.lane.b32.xlu0 %v293, 1
  %v405 = vpop.permute.xlu0 %404
  %406 = vrot.lane.b32.xlu0 %v297, 1
  %v407 = vpop.permute.xlu0 %406
  %408 = vrot.lane.b32.xlu0 %v294, 1
  %v409 = vpop.permute.xlu0 %408
  %410 = vrot.lane.b32.xlu0 %v298, 1
  %v411 = vpop.permute.xlu0 %410
  %vm412 = vcmp.lt.s32.totalorder %v300, 1
  %v413 = vsel %vm412, %v405, %v409
  %v414 = vsel %vm412, %v407, %v411
  %v415 = vsel %vm412, %v401, %v405
  %v416 = vsel %vm412, %v403, %v407
  %v417 = vsel %vm412, %v397, %v401
  %v418 = vsel %vm412, %v399, %v403
  %v419 = vsel %vm412, %v409, %v397
  %v420 = vsel %vm412, %v411, %v399
  %v421 = vmul.f32 %v419, %v332
  %v422 = vmul.f32 %v417, %v333
  %v423 = vmul.f32 %v415, %v334
  %v424 = vmul.f32 %v413, %v335
  %v425 = vmul.f32 %v420, %v332
  %v426 = vmul.f32 %v418, %v333
  %v427 = vmul.f32 %v416, %v334
  %v428 = vmul.f32 %v414, %v335
  %429 = vrot.lane.b32.xlu0 %v291, 127
  %v430 = vpop.permute.xlu0 %429
  %431 = vrot.lane.b32.xlu0 %v295, 127
  %v432 = vpop.permute.xlu0 %431
  %433 = vrot.lane.b32.xlu0 %v292, 127
  %v434 = vpop.permute.xlu0 %433
  %435 = vrot.lane.b32.xlu0 %v296, 127
  %v436 = vpop.permute.xlu0 %435
  %437 = vrot.lane.b32.xlu0 %v293, 127
  %v438 = vpop.permute.xlu0 %437
  %439 = vrot.lane.b32.xlu0 %v297, 127
  %v440 = vpop.permute.xlu0 %439
  %441 = vrot.lane.b32.xlu0 %v294, 127
  %v442 = vpop.permute.xlu0 %441
  %443 = vrot.lane.b32.xlu0 %v298, 127
  %v444 = vpop.permute.xlu0 %443
  %vm445 = vcmp.lt.s32.totalorder %v300, 127
  %v446 = vsel %vm445, %v438, %v442
  %v447 = vsel %vm445, %v440, %v444
  %v448 = vsel %vm445, %v434, %v438
  %v449 = vsel %vm445, %v436, %v440
  %v450 = vsel %vm445, %v430, %v434
  %v451 = vsel %vm445, %v432, %v436
  %v452 = vsel %vm445, %v442, %v430
  %v453 = vsel %vm445, %v444, %v432
  %v454 = vmul.f32 %v450, %v344
  %v455 = vmul.f32 %v448, %v345
  %v456 = vmul.f32 %v446, %v346
  %v457 = vmul.f32 %v452, %v347
  %v458 = vmul.f32 %v451, %v344
  %v459 = vmul.f32 %v449, %v345
  %v460 = vmul.f32 %v447, %v346
  %v461 = vmul.f32 %v453, %v347
  %v462 = vld [vmem:[%s2] sm:$0xff]
  %v463 = vld [vmem:[%s2 + $0x8] sm:$0xff]
  %465 = vset.pattern.permute.xlu0 0
  %466 = vperm.xlu0 %465, %v462
  %v467 = vpop.permute.xlu0 %466
  %470 = vset.pattern.permute.xlu0 0
  %471 = vperm.xlu0 %470, %v463
  %v472 = vpop.permute.xlu0 %471
  %v474 = vmul.f32 %v467, %v421
  %v475 = vmul.f32 %v467, %v422
  %v476 = vmul.f32 %v467, %v423
  %v477 = vmul.f32 %v467, %v424
  %v478 = vmul.f32 %v472, %v425
  %v479 = vmul.f32 %v472, %v426
  %v480 = vmul.f32 %v472, %v427
  %v481 = vmul.f32 %v472, %v428
  %482 = vset.pattern.permute.xlu0 1
  %483 = vperm.xlu0 %482, %v462
  %v484 = vpop.permute.xlu0 %483
  %486 = vset.pattern.permute.xlu0 1
  %487 = vperm.xlu0 %486, %v463
  %v488 = vpop.permute.xlu0 %487
  %v490 = vmul.f32 %v484, %v291
  %v491 = vmul.f32 %v484, %v292
  %v492 = vmul.f32 %v484, %v293
  %v493 = vmul.f32 %v484, %v294
  %v494 = vmul.f32 %v488, %v295
  %v495 = vmul.f32 %v488, %v296
  %v496 = vmul.f32 %v488, %v297
  %v497 = vmul.f32 %v488, %v298
  %v498 = vadd.f32 %v474, %v490
  %v499 = vadd.f32 %v475, %v491
  %v500 = vadd.f32 %v476, %v492
  %v501 = vadd.f32 %v477, %v493
  %v502 = vadd.f32 %v478, %v494
  %v503 = vadd.f32 %v479, %v495
  %v504 = vadd.f32 %v480, %v496
  %v505 = vadd.f32 %v481, %v497
  %506 = vset.pattern.permute.xlu0 2
  %507 = vperm.xlu0 %506, %v462
  %v508 = vpop.permute.xlu0 %507
  %510 = vset.pattern.permute.xlu0 2
  %511 = vperm.xlu0 %510, %v463
  %v512 = vpop.permute.xlu0 %511
  %v514 = vmul.f32 %v508, %v454
  %v515 = vmul.f32 %v508, %v455
  %v516 = vmul.f32 %v508, %v456
  %v517 = vmul.f32 %v508, %v457
  %v518 = vmul.f32 %v512, %v458
  %v519 = vmul.f32 %v512, %v459
  %v520 = vmul.f32 %v512, %v460
  %v521 = vmul.f32 %v512, %v461
  %v522 = vadd.f32 %v498, %v514
  %v523 = vadd.f32 %v499, %v515
  %v524 = vadd.f32 %v500, %v516
  %v525 = vadd.f32 %v501, %v517
  %v526 = vadd.f32 %v502, %v518
  %v527 = vadd.f32 %v503, %v519
  %v528 = vadd.f32 %v504, %v520
  %v529 = vadd.f32 %v505, %v521
  %530 = vrot.lane.b32.xlu0 %v522, 8
  %v531 = vpop.permute.xlu0 %530
  %532 = vrot.lane.b32.xlu0 %v526, 8
  %v533 = vpop.permute.xlu0 %532
  %534 = vrot.lane.b32.xlu0 %v523, 8
  %v535 = vpop.permute.xlu0 %534
  %536 = vrot.lane.b32.xlu0 %v527, 8
  %v537 = vpop.permute.xlu0 %536
  %538 = vrot.lane.b32.xlu0 %v524, 8
  %v539 = vpop.permute.xlu0 %538
  %540 = vrot.lane.b32.xlu0 %v528, 8
  %v541 = vpop.permute.xlu0 %540
  %542 = vrot.lane.b32.xlu0 %v525, 8
  %v543 = vpop.permute.xlu0 %542
  %544 = vrot.lane.b32.xlu0 %v529, 8
  %v545 = vpop.permute.xlu0 %544
  %vm546 = vcmp.lt.s32.totalorder %v300, 8
  %v547 = vsel %vm546, %v539, %v543
  %v548 = vsel %vm546, %v541, %v545
  %v549 = vsel %vm546, %v535, %v539
  %v550 = vsel %vm546, %v537, %v541
  %v551 = vsel %vm546, %v531, %v535
  %v552 = vsel %vm546, %v533, %v537
  %v553 = vsel %vm546, %v543, %v531
  %v554 = vsel %vm546, %v545, %v533
  %v555 = vmul.f32 %v553, %v356
  %v556 = vmul.f32 %v551, %v357
  %v557 = vmul.f32 %v549, %v358
  %v558 = vmul.f32 %v547, %v359
  %v559 = vmul.f32 %v554, %v356
  %v560 = vmul.f32 %v552, %v357
  %v561 = vmul.f32 %v550, %v358
  %v562 = vmul.f32 %v548, %v359
  %563 = vset.pattern.permute.xlu0 3
  %564 = vperm.xlu0 %563, %v462
  %v565 = vpop.permute.xlu0 %564
  %567 = vset.pattern.permute.xlu0 3
  %568 = vperm.xlu0 %567, %v463
  %v569 = vpop.permute.xlu0 %568
  %v571 = vmul.f32 %v565, %v421
  %v572 = vmul.f32 %v565, %v422
  %v573 = vmul.f32 %v565, %v423
  %v574 = vmul.f32 %v565, %v424
  %v575 = vmul.f32 %v569, %v425
  %v576 = vmul.f32 %v569, %v426
  %v577 = vmul.f32 %v569, %v427
  %v578 = vmul.f32 %v569, %v428
  %579 = vset.pattern.permute.xlu0 4
  %580 = vperm.xlu0 %579, %v462
  %v581 = vpop.permute.xlu0 %580
  %583 = vset.pattern.permute.xlu0 4
  %584 = vperm.xlu0 %583, %v463
  %v585 = vpop.permute.xlu0 %584
  %v587 = vmul.f32 %v581, %v291
  %v588 = vmul.f32 %v581, %v292
  %v589 = vmul.f32 %v581, %v293
  %v590 = vmul.f32 %v581, %v294
  %v591 = vmul.f32 %v585, %v295
  %v592 = vmul.f32 %v585, %v296
  %v593 = vmul.f32 %v585, %v297
  %v594 = vmul.f32 %v585, %v298
  %v595 = vadd.f32 %v571, %v587
  %v596 = vadd.f32 %v572, %v588
  %v597 = vadd.f32 %v573, %v589
  %v598 = vadd.f32 %v574, %v590
  %v599 = vadd.f32 %v575, %v591
  %v600 = vadd.f32 %v576, %v592
  %v601 = vadd.f32 %v577, %v593
  %v602 = vadd.f32 %v578, %v594
  %603 = vset.pattern.permute.xlu0 5
  %604 = vperm.xlu0 %603, %v462
  %v605 = vpop.permute.xlu0 %604
  %607 = vset.pattern.permute.xlu0 5
  %608 = vperm.xlu0 %607, %v463
  %v609 = vpop.permute.xlu0 %608
  %v611 = vmul.f32 %v605, %v454
  %v612 = vmul.f32 %v605, %v455
  %v613 = vmul.f32 %v605, %v456
  %v614 = vmul.f32 %v605, %v457
  %v615 = vmul.f32 %v609, %v458
  %v616 = vmul.f32 %v609, %v459
  %v617 = vmul.f32 %v609, %v460
  %v618 = vmul.f32 %v609, %v461
  %v619 = vadd.f32 %v595, %v611
  %v620 = vadd.f32 %v596, %v612
  %v621 = vadd.f32 %v597, %v613
  %v622 = vadd.f32 %v598, %v614
  %v623 = vadd.f32 %v599, %v615
  %v624 = vadd.f32 %v600, %v616
  %v625 = vadd.f32 %v601, %v617
  %v626 = vadd.f32 %v602, %v618
  %v627 = vadd.f32 %v555, %v619
  %v628 = vadd.f32 %v556, %v620
  %v629 = vadd.f32 %v557, %v621
  %v630 = vadd.f32 %v558, %v622
  %v631 = vadd.f32 %v559, %v623
  %v632 = vadd.f32 %v560, %v624
  %v633 = vadd.f32 %v561, %v625
  %v634 = vadd.f32 %v562, %v626
  %635 = vset.pattern.permute.xlu0 6
  %636 = vperm.xlu0 %635, %v462
  %v637 = vpop.permute.xlu0 %636
  %639 = vset.pattern.permute.xlu0 6
  %640 = vperm.xlu0 %639, %v463
  %v641 = vpop.permute.xlu0 %640
  %v643 = vmul.f32 %v637, %v421
  %v644 = vmul.f32 %v637, %v422
  %v645 = vmul.f32 %v637, %v423
  %v646 = vmul.f32 %v637, %v424
  %v647 = vmul.f32 %v641, %v425
  %v648 = vmul.f32 %v641, %v426
  %v649 = vmul.f32 %v641, %v427
  %v650 = vmul.f32 %v641, %v428
  %651 = vset.pattern.permute.xlu0 7
  %652 = vperm.xlu0 %651, %v462
  %v653 = vpop.permute.xlu0 %652
  %655 = vset.pattern.permute.xlu0 7
  %656 = vperm.xlu0 %655, %v463
  %v657 = vpop.permute.xlu0 %656
  %v659 = vmul.f32 %v653, %v291
  %v660 = vmul.f32 %v653, %v292
  %v661 = vmul.f32 %v653, %v293
  %v662 = vmul.f32 %v653, %v294
  %v663 = vmul.f32 %v657, %v295
  %v664 = vmul.f32 %v657, %v296
  %v665 = vmul.f32 %v657, %v297
  %v666 = vmul.f32 %v657, %v298
  %v667 = vadd.f32 %v643, %v659
  %v668 = vadd.f32 %v644, %v660
  %v669 = vadd.f32 %v645, %v661
  %v670 = vadd.f32 %v646, %v662
  %v671 = vadd.f32 %v647, %v663
  %v672 = vadd.f32 %v648, %v664
  %v673 = vadd.f32 %v649, %v665
  %v674 = vadd.f32 %v650, %v666
  %675 = vset.pattern.permute.xlu0 8
  %676 = vperm.xlu0 %675, %v462
  %v677 = vpop.permute.xlu0 %676
  %679 = vset.pattern.permute.xlu0 8
  %680 = vperm.xlu0 %679, %v463
  %v681 = vpop.permute.xlu0 %680
  %v683 = vmul.f32 %v677, %v454
  %v684 = vmul.f32 %v677, %v455
  %v685 = vmul.f32 %v677, %v456
  %v686 = vmul.f32 %v677, %v457
  %v687 = vmul.f32 %v681, %v458
  %v688 = vmul.f32 %v681, %v459
  %v689 = vmul.f32 %v681, %v460
  %v690 = vmul.f32 %v681, %v461
  %v691 = vadd.f32 %v667, %v683
  %v692 = vadd.f32 %v668, %v684
  %v693 = vadd.f32 %v669, %v685
  %v694 = vadd.f32 %v670, %v686
  %v695 = vadd.f32 %v671, %v687
  %v696 = vadd.f32 %v672, %v688
  %v697 = vadd.f32 %v673, %v689
  %v698 = vadd.f32 %v674, %v690
  %699 = vrot.lane.b32.xlu0 %v691, 120
  %v700 = vpop.permute.xlu0 %699
  %701 = vrot.lane.b32.xlu0 %v695, 120
  %v702 = vpop.permute.xlu0 %701
  %703 = vrot.lane.b32.xlu0 %v692, 120
  %v704 = vpop.permute.xlu0 %703
  %705 = vrot.lane.b32.xlu0 %v696, 120
  %v706 = vpop.permute.xlu0 %705
  %707 = vrot.lane.b32.xlu0 %v693, 120
  %v708 = vpop.permute.xlu0 %707
  %709 = vrot.lane.b32.xlu0 %v697, 120
  %v710 = vpop.permute.xlu0 %709
  %711 = vrot.lane.b32.xlu0 %v694, 120
  %v712 = vpop.permute.xlu0 %711
  %713 = vrot.lane.b32.xlu0 %v698, 120
  %v714 = vpop.permute.xlu0 %713
  %vm715 = vcmp.lt.s32.totalorder %v300, 120
  %v716 = vsel %vm715, %v708, %v712
  %v717 = vsel %vm715, %v710, %v714
  %v718 = vsel %vm715, %v704, %v708
  %v719 = vsel %vm715, %v706, %v710
  %v720 = vsel %vm715, %v700, %v704
  %v721 = vsel %vm715, %v702, %v706
  %v722 = vsel %vm715, %v712, %v700
  %v723 = vsel %vm715, %v714, %v702
  %v724 = vmul.f32 %v720, %v368
  %v725 = vmul.f32 %v718, %v369
  %v726 = vmul.f32 %v716, %v370
  %v727 = vmul.f32 %v722, %v371
  %v728 = vmul.f32 %v721, %v368
  %v729 = vmul.f32 %v719, %v369
  %v730 = vmul.f32 %v717, %v370
  %v731 = vmul.f32 %v723, %v371
  %v732 = vadd.f32 %v627, %v724
  %v733 = vadd.f32 %v628, %v725
  %v734 = vadd.f32 %v629, %v726
  %v735 = vadd.f32 %v630, %v727
  %v736 = vadd.f32 %v631, %v728
  %v737 = vadd.f32 %v632, %v729
  %v738 = vadd.f32 %v633, %v730
  %v739 = vadd.f32 %v634, %v731
  %740 = vrot.lane.b32.xlu0 %v732, 64
  %v741 = vpop.permute.xlu0 %740
  %742 = vrot.lane.b32.xlu0 %v736, 64
  %v743 = vpop.permute.xlu0 %742
  %744 = vrot.lane.b32.xlu0 %v733, 64
  %v745 = vpop.permute.xlu0 %744
  %746 = vrot.lane.b32.xlu0 %v737, 64
  %v747 = vpop.permute.xlu0 %746
  %748 = vrot.lane.b32.xlu0 %v734, 64
  %v749 = vpop.permute.xlu0 %748
  %750 = vrot.lane.b32.xlu0 %v738, 64
  %v751 = vpop.permute.xlu0 %750
  %752 = vrot.lane.b32.xlu0 %v735, 64
  %v753 = vpop.permute.xlu0 %752
  %754 = vrot.lane.b32.xlu0 %v739, 64
  %v755 = vpop.permute.xlu0 %754
  %vm756 = vcmp.lt.s32.totalorder %v300, 64
  %v757 = vsel %vm756, %v749, %v753
  %v758 = vsel %vm756, %v751, %v755
  %v759 = vsel %vm756, %v745, %v749
  %v760 = vsel %vm756, %v747, %v751
  %v761 = vsel %vm756, %v741, %v745
  %v762 = vsel %vm756, %v743, %v747
  %v763 = vsel %vm756, %v753, %v741
  %v764 = vsel %vm756, %v755, %v743
  %v765 = vmul.f32 %v763, %v380
  %v766 = vmul.f32 %v761, %v381
  %v767 = vmul.f32 %v759, %v382
  %v768 = vmul.f32 %v757, %v383
  %v769 = vmul.f32 %v764, %v380
  %v770 = vmul.f32 %v762, %v381
  %v771 = vmul.f32 %v760, %v382
  %v772 = vmul.f32 %v758, %v383
  %773 = vset.pattern.permute.xlu0 9
  %774 = vperm.xlu0 %773, %v462
  %v775 = vpop.permute.xlu0 %774
  %777 = vset.pattern.permute.xlu0 9
  %778 = vperm.xlu0 %777, %v463
  %v779 = vpop.permute.xlu0 %778
  %v781 = vmul.f32 %v775, %v421
  %v782 = vmul.f32 %v775, %v422
  %v783 = vmul.f32 %v775, %v423
  %v784 = vmul.f32 %v775, %v424
  %v785 = vmul.f32 %v779, %v425
  %v786 = vmul.f32 %v779, %v426
  %v787 = vmul.f32 %v779, %v427
  %v788 = vmul.f32 %v779, %v428
  %789 = vset.pattern.permute.xlu0 10
  %790 = vperm.xlu0 %789, %v462
  %v791 = vpop.permute.xlu0 %790
  %793 = vset.pattern.permute.xlu0 10
  %794 = vperm.xlu0 %793, %v463
  %v795 = vpop.permute.xlu0 %794
  %v797 = vmul.f32 %v791, %v291
  %v798 = vmul.f32 %v791, %v292
  %v799 = vmul.f32 %v791, %v293
  %v800 = vmul.f32 %v791, %v294
  %v801 = vmul.f32 %v795, %v295
  %v802 = vmul.f32 %v795, %v296
  %v803 = vmul.f32 %v795, %v297
  %v804 = vmul.f32 %v795, %v298
  %v805 = vadd.f32 %v781, %v797
  %v806 = vadd.f32 %v782, %v798
  %v807 = vadd.f32 %v783, %v799
  %v808 = vadd.f32 %v784, %v800
  %v809 = vadd.f32 %v785, %v801
  %v810 = vadd.f32 %v786, %v802
  %v811 = vadd.f32 %v787, %v803
  %v812 = vadd.f32 %v788, %v804
  %813 = vset.pattern.permute.xlu0 11
  %814 = vperm.xlu0 %813, %v462
  %v815 = vpop.permute.xlu0 %814
  %817 = vset.pattern.permute.xlu0 11
  %818 = vperm.xlu0 %817, %v463
  %v819 = vpop.permute.xlu0 %818
  %v821 = vmul.f32 %v815, %v454
  %v822 = vmul.f32 %v815, %v455
  %v823 = vmul.f32 %v815, %v456
  %v824 = vmul.f32 %v815, %v457
  %v825 = vmul.f32 %v819, %v458
  %v826 = vmul.f32 %v819, %v459
  %v827 = vmul.f32 %v819, %v460
  %v828 = vmul.f32 %v819, %v461
  %v829 = vadd.f32 %v805, %v821
  %v830 = vadd.f32 %v806, %v822
  %v831 = vadd.f32 %v807, %v823
  %v832 = vadd.f32 %v808, %v824
  %v833 = vadd.f32 %v809, %v825
  %v834 = vadd.f32 %v810, %v826
  %v835 = vadd.f32 %v811, %v827
  %v836 = vadd.f32 %v812, %v828
  %837 = vrot.lane.b32.xlu0 %v829, 8
  %v838 = vpop.permute.xlu0 %837
  %839 = vrot.lane.b32.xlu0 %v833, 8
  %v840 = vpop.permute.xlu0 %839
  %841 = vrot.lane.b32.xlu0 %v830, 8
  %v842 = vpop.permute.xlu0 %841
  %843 = vrot.lane.b32.xlu0 %v834, 8
  %v844 = vpop.permute.xlu0 %843
  %845 = vrot.lane.b32.xlu0 %v831, 8
  %v846 = vpop.permute.xlu0 %845
  %847 = vrot.lane.b32.xlu0 %v835, 8
  %v848 = vpop.permute.xlu0 %847
  %849 = vrot.lane.b32.xlu0 %v832, 8
  %v850 = vpop.permute.xlu0 %849
  %851 = vrot.lane.b32.xlu0 %v836, 8
  %v852 = vpop.permute.xlu0 %851
  %v853 = vsel %vm546, %v846, %v850
  %v854 = vsel %vm546, %v848, %v852
  %v855 = vsel %vm546, %v842, %v846
  %v856 = vsel %vm546, %v844, %v848
  %v857 = vsel %vm546, %v838, %v842
  %v858 = vsel %vm546, %v840, %v844
  %v859 = vsel %vm546, %v850, %v838
  %v860 = vsel %vm546, %v852, %v840
  %v861 = vmul.f32 %v859, %v356
  %v862 = vmul.f32 %v857, %v357
  %v863 = vmul.f32 %v855, %v358
  %v864 = vmul.f32 %v853, %v359
  %v865 = vmul.f32 %v860, %v356
  %v866 = vmul.f32 %v858, %v357
  %v867 = vmul.f32 %v856, %v358
  %v868 = vmul.f32 %v854, %v359
  %869 = vset.pattern.permute.xlu0 12
  %870 = vperm.xlu0 %869, %v462
  %v871 = vpop.permute.xlu0 %870
  %873 = vset.pattern.permute.xlu0 12
  %874 = vperm.xlu0 %873, %v463
  %v875 = vpop.permute.xlu0 %874
  %v877 = vmul.f32 %v871, %v421
  %v878 = vmul.f32 %v871, %v422
  %v879 = vmul.f32 %v871, %v423
  %v880 = vmul.f32 %v871, %v424
  %v881 = vmul.f32 %v875, %v425
  %v882 = vmul.f32 %v875, %v426
  %v883 = vmul.f32 %v875, %v427
  %v884 = vmul.f32 %v875, %v428
  %885 = vset.pattern.permute.xlu0 13
  %886 = vperm.xlu0 %885, %v462
  %v887 = vpop.permute.xlu0 %886
  %889 = vset.pattern.permute.xlu0 13
  %890 = vperm.xlu0 %889, %v463
  %v891 = vpop.permute.xlu0 %890
  %v893 = vmul.f32 %v887, %v291
  %v894 = vmul.f32 %v887, %v292
  %v895 = vmul.f32 %v887, %v293
  %v896 = vmul.f32 %v887, %v294
  %v897 = vmul.f32 %v891, %v295
  %v898 = vmul.f32 %v891, %v296
  %v899 = vmul.f32 %v891, %v297
  %v900 = vmul.f32 %v891, %v298
  %v901 = vadd.f32 %v877, %v893
  %v902 = vadd.f32 %v878, %v894
  %v903 = vadd.f32 %v879, %v895
  %v904 = vadd.f32 %v880, %v896
  %v905 = vadd.f32 %v881, %v897
  %v906 = vadd.f32 %v882, %v898
  %v907 = vadd.f32 %v883, %v899
  %v908 = vadd.f32 %v884, %v900
  %909 = vset.pattern.permute.xlu0 14
  %910 = vperm.xlu0 %909, %v462
  %v911 = vpop.permute.xlu0 %910
  %913 = vset.pattern.permute.xlu0 14
  %914 = vperm.xlu0 %913, %v463
  %v915 = vpop.permute.xlu0 %914
  %v917 = vmul.f32 %v911, %v454
  %v918 = vmul.f32 %v911, %v455
  %v919 = vmul.f32 %v911, %v456
  %v920 = vmul.f32 %v911, %v457
  %v921 = vmul.f32 %v915, %v458
  %v922 = vmul.f32 %v915, %v459
  %v923 = vmul.f32 %v915, %v460
  %v924 = vmul.f32 %v915, %v461
  %v925 = vadd.f32 %v901, %v917
  %v926 = vadd.f32 %v902, %v918
  %v927 = vadd.f32 %v903, %v919
  %v928 = vadd.f32 %v904, %v920
  %v929 = vadd.f32 %v905, %v921
  %v930 = vadd.f32 %v906, %v922
  %v931 = vadd.f32 %v907, %v923
  %v932 = vadd.f32 %v908, %v924
  %v933 = vadd.f32 %v861, %v925
  %v934 = vadd.f32 %v862, %v926
  %v935 = vadd.f32 %v863, %v927
  %v936 = vadd.f32 %v864, %v928
  %v937 = vadd.f32 %v865, %v929
  %v938 = vadd.f32 %v866, %v930
  %v939 = vadd.f32 %v867, %v931
  %v940 = vadd.f32 %v868, %v932
  %941 = vset.pattern.permute.xlu0 15
  %942 = vperm.xlu0 %941, %v462
  %v943 = vpop.permute.xlu0 %942
  %945 = vset.pattern.permute.xlu0 15
  %946 = vperm.xlu0 %945, %v463
  %v947 = vpop.permute.xlu0 %946
  %v949 = vmul.f32 %v943, %v421
  %v950 = vmul.f32 %v943, %v422
  %v951 = vmul.f32 %v943, %v423
  %v952 = vmul.f32 %v943, %v424
  %v953 = vmul.f32 %v947, %v425
  %v954 = vmul.f32 %v947, %v426
  %v955 = vmul.f32 %v947, %v427
  %v956 = vmul.f32 %v947, %v428
  %957 = vset.pattern.permute.xlu0 16
  %958 = vperm.xlu0 %957, %v462
  %v959 = vpop.permute.xlu0 %958
  %961 = vset.pattern.permute.xlu0 16
  %962 = vperm.xlu0 %961, %v463
  %v963 = vpop.permute.xlu0 %962
  %v965 = vmul.f32 %v959, %v291
  %v966 = vmul.f32 %v959, %v292
  %v967 = vmul.f32 %v959, %v293
  %v968 = vmul.f32 %v959, %v294
  %v969 = vmul.f32 %v963, %v295
  %v970 = vmul.f32 %v963, %v296
  %v971 = vmul.f32 %v963, %v297
  %v972 = vmul.f32 %v963, %v298
  %v973 = vadd.f32 %v949, %v965
  %v974 = vadd.f32 %v950, %v966
  %v975 = vadd.f32 %v951, %v967
  %v976 = vadd.f32 %v952, %v968
  %v977 = vadd.f32 %v953, %v969
  %v978 = vadd.f32 %v954, %v970
  %v979 = vadd.f32 %v955, %v971
  %v980 = vadd.f32 %v956, %v972
  %981 = vset.pattern.permute.xlu0 17
  %982 = vperm.xlu0 %981, %v462
  %v983 = vpop.permute.xlu0 %982
  %985 = vset.pattern.permute.xlu0 17
  %986 = vperm.xlu0 %985, %v463
  %v987 = vpop.permute.xlu0 %986
  %v989 = vmul.f32 %v983, %v454
  %v990 = vmul.f32 %v983, %v455
  %v991 = vmul.f32 %v983, %v456
  %v992 = vmul.f32 %v983, %v457
  %v993 = vmul.f32 %v987, %v458
  %v994 = vmul.f32 %v987, %v459
  %v995 = vmul.f32 %v987, %v460
  %v996 = vmul.f32 %v987, %v461
  %v997 = vadd.f32 %v973, %v989
  %v998 = vadd.f32 %v974, %v990
  %v999 = vadd.f32 %v975, %v991
  %v1000 = vadd.f32 %v976, %v992
  %v1001 = vadd.f32 %v977, %v993
  %v1002 = vadd.f32 %v978, %v994
  %v1003 = vadd.f32 %v979, %v995
  %v1004 = vadd.f32 %v980, %v996
  %1005 = vrot.lane.b32.xlu0 %v997, 120
  %v1006 = vpop.permute.xlu0 %1005
  %1007 = vrot.lane.b32.xlu0 %v1001, 120
  %v1008 = vpop.permute.xlu0 %1007
  %1009 = vrot.lane.b32.xlu0 %v998, 120
  %v1010 = vpop.permute.xlu0 %1009
  %1011 = vrot.lane.b32.xlu0 %v1002, 120
  %v1012 = vpop.permute.xlu0 %1011
  %1013 = vrot.lane.b32.xlu0 %v999, 120
  %v1014 = vpop.permute.xlu0 %1013
  %1015 = vrot.lane.b32.xlu0 %v1003, 120
  %v1016 = vpop.permute.xlu0 %1015
  %1017 = vrot.lane.b32.xlu0 %v1000, 120
  %v1018 = vpop.permute.xlu0 %1017
  %1019 = vrot.lane.b32.xlu0 %v1004, 120
  %v1020 = vpop.permute.xlu0 %1019
  %v1021 = vsel %vm715, %v1014, %v1018
  %v1022 = vsel %vm715, %v1016, %v1020
  %v1023 = vsel %vm715, %v1010, %v1014
  %v1024 = vsel %vm715, %v1012, %v1016
  %v1025 = vsel %vm715, %v1006, %v1010
  %v1026 = vsel %vm715, %v1008, %v1012
  %v1027 = vsel %vm715, %v1018, %v1006
  %v1028 = vsel %vm715, %v1020, %v1008
  %v1029 = vmul.f32 %v1025, %v368
  %v1030 = vmul.f32 %v1023, %v369
  %v1031 = vmul.f32 %v1021, %v370
  %v1032 = vmul.f32 %v1027, %v371
  %v1033 = vmul.f32 %v1026, %v368
  %v1034 = vmul.f32 %v1024, %v369
  %v1035 = vmul.f32 %v1022, %v370
  %v1036 = vmul.f32 %v1028, %v371
  %v1037 = vadd.f32 %v933, %v1029
  %v1038 = vadd.f32 %v934, %v1030
  %v1039 = vadd.f32 %v935, %v1031
  %v1040 = vadd.f32 %v936, %v1032
  %v1041 = vadd.f32 %v937, %v1033
  %v1042 = vadd.f32 %v938, %v1034
  %v1043 = vadd.f32 %v939, %v1035
  %v1044 = vadd.f32 %v940, %v1036
  %v1045 = vadd.f32 %v765, %v1037
  %v1046 = vadd.f32 %v766, %v1038
  %v1047 = vadd.f32 %v767, %v1039
  %v1048 = vadd.f32 %v768, %v1040
  %v1049 = vadd.f32 %v769, %v1041
  %v1050 = vadd.f32 %v770, %v1042
  %v1051 = vadd.f32 %v771, %v1043
  %v1052 = vadd.f32 %v772, %v1044
  %1053 = vset.pattern.permute.xlu0 18
  %1054 = vperm.xlu0 %1053, %v462
  %v1055 = vpop.permute.xlu0 %1054
  %1057 = vset.pattern.permute.xlu0 18
  %1058 = vperm.xlu0 %1057, %v463
  %v1059 = vpop.permute.xlu0 %1058
  %v1061 = vmul.f32 %v1055, %v421
  %v1062 = vmul.f32 %v1055, %v422
  %v1063 = vmul.f32 %v1055, %v423
  %v1064 = vmul.f32 %v1055, %v424
  %v1065 = vmul.f32 %v1059, %v425
  %v1066 = vmul.f32 %v1059, %v426
  %v1067 = vmul.f32 %v1059, %v427
  %v1068 = vmul.f32 %v1059, %v428
  %1069 = vset.pattern.permute.xlu0 19
  %1070 = vperm.xlu0 %1069, %v462
  %v1071 = vpop.permute.xlu0 %1070
  %1073 = vset.pattern.permute.xlu0 19
  %1074 = vperm.xlu0 %1073, %v463
  %v1075 = vpop.permute.xlu0 %1074
  %v1077 = vmul.f32 %v1071, %v291
  %v1078 = vmul.f32 %v1071, %v292
  %v1079 = vmul.f32 %v1071, %v293
  %v1080 = vmul.f32 %v1071, %v294
  %v1081 = vmul.f32 %v1075, %v295
  %v1082 = vmul.f32 %v1075, %v296
  %v1083 = vmul.f32 %v1075, %v297
  %v1084 = vmul.f32 %v1075, %v298
  %v1085 = vadd.f32 %v1061, %v1077
  %v1086 = vadd.f32 %v1062, %v1078
  %v1087 = vadd.f32 %v1063, %v1079
  %v1088 = vadd.f32 %v1064, %v1080
  %v1089 = vadd.f32 %v1065, %v1081
  %v1090 = vadd.f32 %v1066, %v1082
  %v1091 = vadd.f32 %v1067, %v1083
  %v1092 = vadd.f32 %v1068, %v1084
  %1093 = vset.pattern.permute.xlu0 20
  %1094 = vperm.xlu0 %1093, %v462
  %v1095 = vpop.permute.xlu0 %1094
  %1097 = vset.pattern.permute.xlu0 20
  %1098 = vperm.xlu0 %1097, %v463
  %v1099 = vpop.permute.xlu0 %1098
  %v1101 = vmul.f32 %v1095, %v454
  %v1102 = vmul.f32 %v1095, %v455
  %v1103 = vmul.f32 %v1095, %v456
  %v1104 = vmul.f32 %v1095, %v457
  %v1105 = vmul.f32 %v1099, %v458
  %v1106 = vmul.f32 %v1099, %v459
  %v1107 = vmul.f32 %v1099, %v460
  %v1108 = vmul.f32 %v1099, %v461
  %v1109 = vadd.f32 %v1085, %v1101
  %v1110 = vadd.f32 %v1086, %v1102
  %v1111 = vadd.f32 %v1087, %v1103
  %v1112 = vadd.f32 %v1088, %v1104
  %v1113 = vadd.f32 %v1089, %v1105
  %v1114 = vadd.f32 %v1090, %v1106
  %v1115 = vadd.f32 %v1091, %v1107
  %v1116 = vadd.f32 %v1092, %v1108
  %1117 = vrot.lane.b32.xlu0 %v1109, 8
  %v1118 = vpop.permute.xlu0 %1117
  %1119 = vrot.lane.b32.xlu0 %v1113, 8
  %v1120 = vpop.permute.xlu0 %1119
  %1121 = vrot.lane.b32.xlu0 %v1110, 8
  %v1122 = vpop.permute.xlu0 %1121
  %1123 = vrot.lane.b32.xlu0 %v1114, 8
  %v1124 = vpop.permute.xlu0 %1123
  %1125 = vrot.lane.b32.xlu0 %v1111, 8
  %v1126 = vpop.permute.xlu0 %1125
  %1127 = vrot.lane.b32.xlu0 %v1115, 8
  %v1128 = vpop.permute.xlu0 %1127
  %1129 = vrot.lane.b32.xlu0 %v1112, 8
  %v1130 = vpop.permute.xlu0 %1129
  %1131 = vrot.lane.b32.xlu0 %v1116, 8
  %v1132 = vpop.permute.xlu0 %1131
  %v1133 = vsel %vm546, %v1126, %v1130
  %v1134 = vsel %vm546, %v1128, %v1132
  %v1135 = vsel %vm546, %v1122, %v1126
  %v1136 = vsel %vm546, %v1124, %v1128
  %v1137 = vsel %vm546, %v1118, %v1122
  %v1138 = vsel %vm546, %v1120, %v1124
  %v1139 = vsel %vm546, %v1130, %v1118
  %v1140 = vsel %vm546, %v1132, %v1120
  %v1141 = vmul.f32 %v1139, %v356
  %v1142 = vmul.f32 %v1137, %v357
  %v1143 = vmul.f32 %v1135, %v358
  %v1144 = vmul.f32 %v1133, %v359
  %v1145 = vmul.f32 %v1140, %v356
  %v1146 = vmul.f32 %v1138, %v357
  %v1147 = vmul.f32 %v1136, %v358
  %v1148 = vmul.f32 %v1134, %v359
  %1149 = vset.pattern.permute.xlu0 21
  %1150 = vperm.xlu0 %1149, %v462
  %v1151 = vpop.permute.xlu0 %1150
  %1153 = vset.pattern.permute.xlu0 21
  %1154 = vperm.xlu0 %1153, %v463
  %v1155 = vpop.permute.xlu0 %1154
  %v1157 = vmul.f32 %v1151, %v421
  %v1158 = vmul.f32 %v1151, %v422
  %v1159 = vmul.f32 %v1151, %v423
  %v1160 = vmul.f32 %v1151, %v424
  %v1161 = vmul.f32 %v1155, %v425
  %v1162 = vmul.f32 %v1155, %v426
  %v1163 = vmul.f32 %v1155, %v427
  %v1164 = vmul.f32 %v1155, %v428
  %1165 = vset.pattern.permute.xlu0 22
  %1166 = vperm.xlu0 %1165, %v462
  %v1167 = vpop.permute.xlu0 %1166
  %1169 = vset.pattern.permute.xlu0 22
  %1170 = vperm.xlu0 %1169, %v463
  %v1171 = vpop.permute.xlu0 %1170
  %v1173 = vmul.f32 %v1167, %v291
  %v1174 = vmul.f32 %v1167, %v292
  %v1175 = vmul.f32 %v1167, %v293
  %v1176 = vmul.f32 %v1167, %v294
  %v1177 = vmul.f32 %v1171, %v295
  %v1178 = vmul.f32 %v1171, %v296
  %v1179 = vmul.f32 %v1171, %v297
  %v1180 = vmul.f32 %v1171, %v298
  %v1181 = vadd.f32 %v1157, %v1173
  %v1182 = vadd.f32 %v1158, %v1174
  %v1183 = vadd.f32 %v1159, %v1175
  %v1184 = vadd.f32 %v1160, %v1176
  %v1185 = vadd.f32 %v1161, %v1177
  %v1186 = vadd.f32 %v1162, %v1178
  %v1187 = vadd.f32 %v1163, %v1179
  %v1188 = vadd.f32 %v1164, %v1180
  %1189 = vset.pattern.permute.xlu0 23
  %1190 = vperm.xlu0 %1189, %v462
  %v1191 = vpop.permute.xlu0 %1190
  %1193 = vset.pattern.permute.xlu0 23
  %1194 = vperm.xlu0 %1193, %v463
  %v1195 = vpop.permute.xlu0 %1194
  %v1197 = vmul.f32 %v1191, %v454
  %v1198 = vmul.f32 %v1191, %v455
  %v1199 = vmul.f32 %v1191, %v456
  %v1200 = vmul.f32 %v1191, %v457
  %v1201 = vmul.f32 %v1195, %v458
  %v1202 = vmul.f32 %v1195, %v459
  %v1203 = vmul.f32 %v1195, %v460
  %v1204 = vmul.f32 %v1195, %v461
  %v1205 = vadd.f32 %v1181, %v1197
  %v1206 = vadd.f32 %v1182, %v1198
  %v1207 = vadd.f32 %v1183, %v1199
  %v1208 = vadd.f32 %v1184, %v1200
  %v1209 = vadd.f32 %v1185, %v1201
  %v1210 = vadd.f32 %v1186, %v1202
  %v1211 = vadd.f32 %v1187, %v1203
  %v1212 = vadd.f32 %v1188, %v1204
  %v1213 = vadd.f32 %v1141, %v1205
  %v1214 = vadd.f32 %v1142, %v1206
  %v1215 = vadd.f32 %v1143, %v1207
  %v1216 = vadd.f32 %v1144, %v1208
  %v1217 = vadd.f32 %v1145, %v1209
  %v1218 = vadd.f32 %v1146, %v1210
  %v1219 = vadd.f32 %v1147, %v1211
  %v1220 = vadd.f32 %v1148, %v1212
  %1221 = vset.pattern.permute.xlu0 24
  %1222 = vperm.xlu0 %1221, %v462
  %v1223 = vpop.permute.xlu0 %1222
  %1225 = vset.pattern.permute.xlu0 24
  %1226 = vperm.xlu0 %1225, %v463
  %v1227 = vpop.permute.xlu0 %1226
  %v1229 = vmul.f32 %v1223, %v421
  %v1230 = vmul.f32 %v1223, %v422
  %v1231 = vmul.f32 %v1223, %v423
  %v1232 = vmul.f32 %v1223, %v424
  %v1233 = vmul.f32 %v1227, %v425
  %v1234 = vmul.f32 %v1227, %v426
  %v1235 = vmul.f32 %v1227, %v427
  %v1236 = vmul.f32 %v1227, %v428
  %1237 = vset.pattern.permute.xlu0 25
  %1238 = vperm.xlu0 %1237, %v462
  %v1239 = vpop.permute.xlu0 %1238
  %1241 = vset.pattern.permute.xlu0 25
  %1242 = vperm.xlu0 %1241, %v463
  %v1243 = vpop.permute.xlu0 %1242
  %v1245 = vmul.f32 %v1239, %v291
  %v1246 = vmul.f32 %v1239, %v292
  %v1247 = vmul.f32 %v1239, %v293
  %v1248 = vmul.f32 %v1239, %v294
  %v1249 = vmul.f32 %v1243, %v295
  %v1250 = vmul.f32 %v1243, %v296
  %v1251 = vmul.f32 %v1243, %v297
  %v1252 = vmul.f32 %v1243, %v298
  %v1253 = vadd.f32 %v1229, %v1245
  %v1254 = vadd.f32 %v1230, %v1246
  %v1255 = vadd.f32 %v1231, %v1247
  %v1256 = vadd.f32 %v1232, %v1248
  %v1257 = vadd.f32 %v1233, %v1249
  %v1258 = vadd.f32 %v1234, %v1250
  %v1259 = vadd.f32 %v1235, %v1251
  %v1260 = vadd.f32 %v1236, %v1252
  %1261 = vset.pattern.permute.xlu0 26
  %1262 = vperm.xlu0 %1261, %v462
  %v1263 = vpop.permute.xlu0 %1262
  %1265 = vset.pattern.permute.xlu0 26
  %1266 = vperm.xlu0 %1265, %v463
  %v1267 = vpop.permute.xlu0 %1266
  %v1269 = vmul.f32 %v1263, %v454
  %v1270 = vmul.f32 %v1263, %v455
  %v1271 = vmul.f32 %v1263, %v456
  %v1272 = vmul.f32 %v1263, %v457
  %v1273 = vmul.f32 %v1267, %v458
  %v1274 = vmul.f32 %v1267, %v459
  %v1275 = vmul.f32 %v1267, %v460
  %v1276 = vmul.f32 %v1267, %v461
  %v1277 = vadd.f32 %v1253, %v1269
  %v1278 = vadd.f32 %v1254, %v1270
  %v1279 = vadd.f32 %v1255, %v1271
  %v1280 = vadd.f32 %v1256, %v1272
  %v1281 = vadd.f32 %v1257, %v1273
  %v1282 = vadd.f32 %v1258, %v1274
  %v1283 = vadd.f32 %v1259, %v1275
  %v1284 = vadd.f32 %v1260, %v1276
  %1285 = vrot.lane.b32.xlu0 %v1277, 120
  %v1286 = vpop.permute.xlu0 %1285
  %1287 = vrot.lane.b32.xlu0 %v1281, 120
  %v1288 = vpop.permute.xlu0 %1287
  %1289 = vrot.lane.b32.xlu0 %v1278, 120
  %v1290 = vpop.permute.xlu0 %1289
  %1291 = vrot.lane.b32.xlu0 %v1282, 120
  %v1292 = vpop.permute.xlu0 %1291
  %1293 = vrot.lane.b32.xlu0 %v1279, 120
  %v1294 = vpop.permute.xlu0 %1293
  %1295 = vrot.lane.b32.xlu0 %v1283, 120
  %v1296 = vpop.permute.xlu0 %1295
  %1297 = vrot.lane.b32.xlu0 %v1280, 120
  %v1298 = vpop.permute.xlu0 %1297
  %1299 = vrot.lane.b32.xlu0 %v1284, 120
  %v1300 = vpop.permute.xlu0 %1299
  %v1301 = vsel %vm715, %v1294, %v1298
  %v1302 = vsel %vm715, %v1296, %v1300
  %v1303 = vsel %vm715, %v1290, %v1294
  %v1304 = vsel %vm715, %v1292, %v1296
  %v1305 = vsel %vm715, %v1286, %v1290
  %v1306 = vsel %vm715, %v1288, %v1292
  %v1307 = vsel %vm715, %v1298, %v1286
  %v1308 = vsel %vm715, %v1300, %v1288
  %v1309 = vmul.f32 %v1305, %v368
  %v1310 = vmul.f32 %v1303, %v369
  %v1311 = vmul.f32 %v1301, %v370
  %v1312 = vmul.f32 %v1307, %v371
  %v1313 = vmul.f32 %v1306, %v368
  %v1314 = vmul.f32 %v1304, %v369
  %v1315 = vmul.f32 %v1302, %v370
  %v1316 = vmul.f32 %v1308, %v371
  %v1317 = vadd.f32 %v1213, %v1309
  %v1318 = vadd.f32 %v1214, %v1310
  %v1319 = vadd.f32 %v1215, %v1311
  %v1320 = vadd.f32 %v1216, %v1312
  %v1321 = vadd.f32 %v1217, %v1313
  %v1322 = vadd.f32 %v1218, %v1314
  %v1323 = vadd.f32 %v1219, %v1315
  %v1324 = vadd.f32 %v1220, %v1316
  %1325 = vrot.lane.b32.xlu0 %v1317, 64
  %v1326 = vpop.permute.xlu0 %1325
  %1327 = vrot.lane.b32.xlu0 %v1321, 64
  %v1328 = vpop.permute.xlu0 %1327
  %1329 = vrot.lane.b32.xlu0 %v1318, 64
  %v1330 = vpop.permute.xlu0 %1329
  %1331 = vrot.lane.b32.xlu0 %v1322, 64
  %v1332 = vpop.permute.xlu0 %1331
  %1333 = vrot.lane.b32.xlu0 %v1319, 64
  %v1334 = vpop.permute.xlu0 %1333
  %1335 = vrot.lane.b32.xlu0 %v1323, 64
  %v1336 = vpop.permute.xlu0 %1335
  %1337 = vrot.lane.b32.xlu0 %v1320, 64
  %v1338 = vpop.permute.xlu0 %1337
  %1339 = vrot.lane.b32.xlu0 %v1324, 64
  %v1340 = vpop.permute.xlu0 %1339
  %v1341 = vsel %vm756, %v1334, %v1338
  %v1342 = vsel %vm756, %v1336, %v1340
  %v1343 = vsel %vm756, %v1330, %v1334
  %v1344 = vsel %vm756, %v1332, %v1336
  %v1345 = vsel %vm756, %v1326, %v1330
  %v1346 = vsel %vm756, %v1328, %v1332
  %v1347 = vsel %vm756, %v1338, %v1326
  %v1348 = vsel %vm756, %v1340, %v1328
  %v1349 = vmul.f32 %v1345, %v392
  %v1350 = vmul.f32 %v1343, %v393
  %v1351 = vmul.f32 %v1341, %v394
  %v1352 = vmul.f32 %v1347, %v395
  %v1353 = vmul.f32 %v1346, %v392
  %v1354 = vmul.f32 %v1344, %v393
  %v1355 = vmul.f32 %v1342, %v394
  %v1356 = vmul.f32 %v1348, %v395
  %v1357 = vadd.f32 %v1045, %v1349
  %v1358 = vadd.f32 %v1046, %v1350
  %v1359 = vadd.f32 %v1047, %v1351
  %v1360 = vadd.f32 %v1048, %v1352
  %v1361 = vadd.f32 %v1049, %v1353
  %v1362 = vadd.f32 %v1050, %v1354
  %v1363 = vadd.f32 %v1051, %v1355
  %v1364 = vadd.f32 %v1052, %v1356
  %v1365 = vxor.u32 %v1357, 2147483648
  %v1366 = vxor.u32 %v1358, 2147483648
  %v1367 = vxor.u32 %v1359, 2147483648
  %v1368 = vxor.u32 %v1360, 2147483648
  %v1369 = vxor.u32 %v1361, 2147483648
  %v1370 = vxor.u32 %v1362, 2147483648
  %v1371 = vxor.u32 %v1363, 2147483648
  %v1372 = vxor.u32 %v1364, 2147483648
  %v1373 = vmul.f32 %v1365, 1.442695
  %v1374 = vpow.pop %v1373
  %v1375 = vmul.f32 %v1366, 1.442695
  %v1376 = vpow.pop %v1375
  %v1377 = vmul.f32 %v1367, 1.442695
  %v1378 = vpow.pop %v1377
  %v1379 = vmul.f32 %v1368, 1.442695
  %v1380 = vpow.pop %v1379
  %v1381 = vmul.f32 %v1369, 1.442695
  %v1382 = vpow.pop %v1381
  %v1383 = vmul.f32 %v1370, 1.442695
  %v1384 = vpow.pop %v1383
  %v1385 = vmul.f32 %v1371, 1.442695
  %v1386 = vpow.pop %v1385
  %v1387 = vmul.f32 %v1372, 1.442695
  %v1388 = vpow.pop %v1387
  %v1389 = vadd.f32 %v1374, 1.0
  %v1390 = vadd.f32 %v1376, 1.0
  %v1391 = vadd.f32 %v1378, 1.0
  %v1392 = vadd.f32 %v1380, 1.0
  %v1393 = vadd.f32 %v1382, 1.0
  %v1394 = vadd.f32 %v1384, 1.0
  %v1395 = vadd.f32 %v1386, 1.0
  %v1396 = vadd.f32 %v1388, 1.0
  %v1397 = vrcp.pop %v1389
  %v1398 = vmul.f32 %v1389, %v1397
  %v1399 = vsub.f32 1.0, %v1398
  %v1400 = vmul.f32 %v1397, %v1399
  %v1401 = vadd.f32 %v1397, %v1400
  %vm1402 = vweird.f32 %v1389
  %vm1403 = vweird.f32 %v1397
  %vm1404 = vmor %vm1402, %vm1403
  %v1405 = vsel %vm1404, %v1397, %v1401
  %v1406 = vand.u32 2147483647, %v1389
  %vm1407 = vcmp.eq.f32.partialorder %v1406, 8.507059e+37
  %v1408 = vand.u32 %v1389, 2147483648
  %v1409 = vor.u32 1.1754944e-38, %v1408
  %v1410 = vsel %vm1407, %v1409, %v1405
  %v1411 = vmul.f32 1.0, %v1410
  %v1412 = vrcp.pop %v1390
  %v1413 = vmul.f32 %v1390, %v1412
  %v1414 = vsub.f32 1.0, %v1413
  %v1415 = vmul.f32 %v1412, %v1414
  %v1416 = vadd.f32 %v1412, %v1415
  %vm1417 = vweird.f32 %v1390
  %vm1418 = vweird.f32 %v1412
  %vm1419 = vmor %vm1417, %vm1418
  %v1420 = vsel %vm1419, %v1412, %v1416
  %v1421 = vand.u32 2147483647, %v1390
  %vm1422 = vcmp.eq.f32.partialorder %v1421, 8.507059e+37
  %v1423 = vand.u32 %v1390, 2147483648
  %v1424 = vor.u32 1.1754944e-38, %v1423
  %v1425 = vsel %vm1422, %v1424, %v1420
  %v1426 = vmul.f32 1.0, %v1425
  %v1427 = vrcp.pop %v1391
  %v1428 = vmul.f32 %v1391, %v1427
  %v1429 = vsub.f32 1.0, %v1428
  %v1430 = vmul.f32 %v1427, %v1429
  %v1431 = vadd.f32 %v1427, %v1430
  %vm1432 = vweird.f32 %v1391
  %vm1433 = vweird.f32 %v1427
  %vm1434 = vmor %vm1432, %vm1433
  %v1435 = vsel %vm1434, %v1427, %v1431
  %v1436 = vand.u32 2147483647, %v1391
  %vm1437 = vcmp.eq.f32.partialorder %v1436, 8.507059e+37
  %v1438 = vand.u32 %v1391, 2147483648
  %v1439 = vor.u32 1.1754944e-38, %v1438
  %v1440 = vsel %vm1437, %v1439, %v1435
  %v1441 = vmul.f32 1.0, %v1440
  %v1442 = vrcp.pop %v1392
  %v1443 = vmul.f32 %v1392, %v1442
  %v1444 = vsub.f32 1.0, %v1443
  %v1445 = vmul.f32 %v1442, %v1444
  %v1446 = vadd.f32 %v1442, %v1445
  %vm1447 = vweird.f32 %v1392
  %vm1448 = vweird.f32 %v1442
  %vm1449 = vmor %vm1447, %vm1448
  %v1450 = vsel %vm1449, %v1442, %v1446
  %v1451 = vand.u32 2147483647, %v1392
  %vm1452 = vcmp.eq.f32.partialorder %v1451, 8.507059e+37
  %v1453 = vand.u32 %v1392, 2147483648
  %v1454 = vor.u32 1.1754944e-38, %v1453
  %v1455 = vsel %vm1452, %v1454, %v1450
  %v1456 = vmul.f32 1.0, %v1455
  %v1457 = vrcp.pop %v1393
  %v1458 = vmul.f32 %v1393, %v1457
  %v1459 = vsub.f32 1.0, %v1458
  %v1460 = vmul.f32 %v1457, %v1459
  %v1461 = vadd.f32 %v1457, %v1460
  %vm1462 = vweird.f32 %v1393
  %vm1463 = vweird.f32 %v1457
  %vm1464 = vmor %vm1462, %vm1463
  %v1465 = vsel %vm1464, %v1457, %v1461
  %v1466 = vand.u32 2147483647, %v1393
  %vm1467 = vcmp.eq.f32.partialorder %v1466, 8.507059e+37
  %v1468 = vand.u32 %v1393, 2147483648
  %v1469 = vor.u32 1.1754944e-38, %v1468
  %v1470 = vsel %vm1467, %v1469, %v1465
  %v1471 = vmul.f32 1.0, %v1470
  %v1472 = vrcp.pop %v1394
  %v1473 = vmul.f32 %v1394, %v1472
  %v1474 = vsub.f32 1.0, %v1473
  %v1475 = vmul.f32 %v1472, %v1474
  %v1476 = vadd.f32 %v1472, %v1475
  %vm1477 = vweird.f32 %v1394
  %vm1478 = vweird.f32 %v1472
  %vm1479 = vmor %vm1477, %vm1478
  %v1480 = vsel %vm1479, %v1472, %v1476
  %v1481 = vand.u32 2147483647, %v1394
  %vm1482 = vcmp.eq.f32.partialorder %v1481, 8.507059e+37
  %v1483 = vand.u32 %v1394, 2147483648
  %v1484 = vor.u32 1.1754944e-38, %v1483
  %v1485 = vsel %vm1482, %v1484, %v1480
  %v1486 = vmul.f32 1.0, %v1485
  %v1487 = vrcp.pop %v1395
  %v1488 = vmul.f32 %v1395, %v1487
  %v1489 = vsub.f32 1.0, %v1488
  %v1490 = vmul.f32 %v1487, %v1489
  %v1491 = vadd.f32 %v1487, %v1490
  %vm1492 = vweird.f32 %v1395
  %vm1493 = vweird.f32 %v1487
  %vm1494 = vmor %vm1492, %vm1493
  %v1495 = vsel %vm1494, %v1487, %v1491
  %v1496 = vand.u32 2147483647, %v1395
  %vm1497 = vcmp.eq.f32.partialorder %v1496, 8.507059e+37
  %v1498 = vand.u32 %v1395, 2147483648
  %v1499 = vor.u32 1.1754944e-38, %v1498
  %v1500 = vsel %vm1497, %v1499, %v1495
  %v1501 = vmul.f32 1.0, %v1500
  %v1502 = vrcp.pop %v1396
  %v1503 = vmul.f32 %v1396, %v1502
  %v1504 = vsub.f32 1.0, %v1503
  %v1505 = vmul.f32 %v1502, %v1504
  %v1506 = vadd.f32 %v1502, %v1505
  %vm1507 = vweird.f32 %v1396
  %vm1508 = vweird.f32 %v1502
  %vm1509 = vmor %vm1507, %vm1508
  %v1510 = vsel %vm1509, %v1502, %v1506
  %v1511 = vand.u32 2147483647, %v1396
  %vm1512 = vcmp.eq.f32.partialorder %v1511, 8.507059e+37
  %v1513 = vand.u32 %v1396, 2147483648
  %v1514 = vor.u32 1.1754944e-38, %v1513
  %v1515 = vsel %vm1512, %v1514, %v1510
  %v1516 = vmul.f32 1.0, %v1515
  %v1517 = vmul.f32 %v1357, %v1411
  %v1518 = vmul.f32 %v1358, %v1426
  %v1519 = vmul.f32 %v1359, %v1441
  %v1520 = vmul.f32 %v1360, %v1456
  %v1521 = vmul.f32 %v1361, %v1471
  %v1522 = vmul.f32 %v1362, %v1486
  %v1523 = vmul.f32 %v1363, %v1501
  %v1524 = vmul.f32 %v1364, %v1516
  %v1525 = vadd.f32 %v1517, %v1518
  %1526 = vadd.xlane.f32.xlu0 %v1525
  %v1527 = vpop.xlane.xlu0 %1526
  %v1528 = vadd.f32 %v1521, %v1522
  %1529 = vadd.xlane.f32.xlu0 %v1528
  %v1530 = vpop.xlane.xlu0 %1529
  %v1531 = vrcp.pop 256.0
  %v1532 = vmul.f32 256.0, %v1531
  %v1533 = vsub.f32 1.0, %v1532
  %v1534 = vmul.f32 %v1531, %v1533
  %v1535 = vadd.f32 %v1531, %v1534
  %vm1536 = vweird.f32 %v1531
  %v1537 = vsel %vm1536, %v1531, %v1535
  %v1538 = vmul.f32 %v1527, %v1537
  %v1539 = vmul.f32 %v1530, %v1537
  %v1540 = vadd.f32 %v1519, %v1520
  %1541 = vadd.xlane.f32.xlu0 %v1540
  %v1542 = vpop.xlane.xlu0 %1541
  %v1543 = vadd.f32 %v1523, %v1524
  %1544 = vadd.xlane.f32.xlu0 %v1543
  %v1545 = vpop.xlane.xlu0 %1544
  %v1546 = vmul.f32 %v1542, %v1537
  %v1547 = vmul.f32 %v1545, %v1537
  %vm1548 = vcmask 7168
  %v1549 = vsel %vm1548, %v1538, %v1546
  %v1550 = vsel %vm1548, %v1539, %v1547
  %v1551 = vld [vmem:[%s3] sm:$0xff]
  %v1552 = vld [vmem:[%s4] sm:$0xff]
  %1554 = vset.pattern.permute.xlu0 0
  %1555 = vperm.xlu0 %1554, %v1552
  %v1556 = vpop.permute.xlu0 %1555
  %vm1558 = vcmask 130048
  %v1560 = vsel %vm1558, %v1551, 0
  %1562 = vmatpush.msra.mxu0 0.0
  %1563 = vmatpush.msra.mxu0 0.0
  %1564 = vmatpush.msra.mxu0 0.0
  %1565 = vmatpush.msra.mxu0 0.0
  %1566 = vmatpush.msra.mxu0 0.0
  %1567 = vmatpush.msra.mxu0 0.0
  %1568 = vmatpush.msra.mxu0 0.0
  %1569 = vmatpush.msra.mxu0 0.0
  %1570 = vmatpush.msra.mxu0 0.0
  %1571 = vmatpush.msra.mxu0 0.0
  %1572 = vmatpush.msra.mxu0 0.0
  %1573 = vmatpush.msra.mxu0 0.0
  %1574 = vmatpush.msra.mxu0 0.0
  %1575 = vmatpush.msra.mxu0 0.0
  %1576 = vmatpush.msra.mxu0 %v1550
  %1577 = vmatpush.msra.mxu0 %v1549
  %1578 = vmatmul.f32.gmra.mxu0 %v1560
  %v1579 = vpop.f32.mrf.mxu0
  %v1580 = vadd.f32 %v1556, %v1579
  %1581 = vdwg.mxu0
  %v1582 = vxor.u32 %v1580, 2147483648
  %v1583 = vmul.f32 %v1582, 1.442695
  %v1584 = vpow.pop %v1583
  %v1585 = vadd.f32 %v1584, 1.0
  %v1586 = vrcp.pop %v1585
  %v1587 = vmul.f32 %v1585, %v1586
  %v1588 = vsub.f32 1.0, %v1587
  %v1589 = vmul.f32 %v1586, %v1588
  %v1590 = vadd.f32 %v1586, %v1589
  %vm1591 = vweird.f32 %v1585
  %vm1592 = vweird.f32 %v1586
  %vm1593 = vmor %vm1591, %vm1592
  %v1594 = vsel %vm1593, %v1586, %v1590
  %v1595 = vand.u32 2147483647, %v1585
  %vm1596 = vcmp.eq.f32.partialorder %v1595, 8.507059e+37
  %v1597 = vand.u32 %v1585, 2147483648
  %v1598 = vor.u32 1.1754944e-38, %v1597
  %v1599 = vsel %vm1596, %v1598, %v1594
  %v1600 = vmul.f32 1.0, %v1599
  %v1601 = vmul.f32 %v1580, %v1600
  %v1602 = vld [vmem:[%s5] sm:$0xff]
  %v1603 = vld [vmem:[%s5 + $0x8] sm:$0xff]
  %v1604 = vld [vmem:[%s6] sm:$0xff]
  %v1605 = vld [vmem:[%s6 + $0x8] sm:$0xff]
  %1607 = vset.pattern.permute.xlu0 0
  %1608 = vperm.xlu0 %1607, %v1604
  %v1609 = vpop.permute.xlu0 %1608
  %1612 = vset.pattern.permute.xlu0 0
  %1613 = vperm.xlu0 %1612, %v1605
  %v1614 = vpop.permute.xlu0 %1613
  %v1617 = vsel %vm40, %v1602, 0
  %v1620 = vsel %vm40, %v1603, 0
  %1622 = vmatpush.msra.mxu0 0.0
  %1623 = vmatpush.msra.mxu0 0.0
  %1624 = vmatpush.msra.mxu0 0.0
  %1625 = vmatpush.msra.mxu0 0.0
  %1626 = vmatpush.msra.mxu0 0.0
  %1627 = vmatpush.msra.mxu0 0.0
  %1628 = vmatpush.msra.mxu0 0.0
  %1629 = vmatpush.msra.mxu0 0.0
  %1630 = vmatpush.msra.mxu0 0.0
  %1631 = vmatpush.msra.mxu0 0.0
  %1632 = vmatpush.msra.mxu0 0.0
  %1633 = vmatpush.msra.mxu0 0.0
  %1634 = vmatpush.msra.mxu0 0.0
  %1635 = vmatpush.msra.mxu0 0.0
  %1636 = vmatpush.msra.mxu0 0.0
  %1637 = vmatpush.msra.mxu0 %v1601
  %1638 = vmatmul.f32.gmra.mxu0 %v1617
  %v1639 = vpop.f32.mrf.mxu0
  %v1640 = vadd.f32 %v1609, %v1639
  %1641 = vmatmul.f32.gmra.mxu0 %v1620
  %v1642 = vpop.f32.mrf.mxu0
  %v1643 = vadd.f32 %v1614, %v1642
  %1644 = vdwg.mxu0
  %v1645 = vxor.u32 %v1640, 2147483648
  %v1646 = vxor.u32 %v1643, 2147483648
  %v1647 = vmul.f32 %v1645, 1.442695
  %v1648 = vpow.pop %v1647
  %v1649 = vmul.f32 %v1646, 1.442695
  %v1650 = vpow.pop %v1649
  %v1651 = vadd.f32 %v1648, 1.0
  %v1652 = vadd.f32 %v1650, 1.0
  %v1653 = vrcp.pop %v1651
  %v1654 = vmul.f32 %v1651, %v1653
  %v1655 = vsub.f32 1.0, %v1654
  %v1656 = vmul.f32 %v1653, %v1655
  %v1657 = vadd.f32 %v1653, %v1656
  %vm1658 = vweird.f32 %v1651
  %vm1659 = vweird.f32 %v1653
  %vm1660 = vmor %vm1658, %vm1659
  %v1661 = vsel %vm1660, %v1653, %v1657
  %v1662 = vand.u32 2147483647, %v1651
  %vm1663 = vcmp.eq.f32.partialorder %v1662, 8.507059e+37
  %v1664 = vand.u32 %v1651, 2147483648
  %v1665 = vor.u32 1.1754944e-38, %v1664
  %v1666 = vsel %vm1663, %v1665, %v1661
  %v1667 = vmul.f32 1.0, %v1666
  %v1668 = vrcp.pop %v1652
  %v1669 = vmul.f32 %v1652, %v1668
  %v1670 = vsub.f32 1.0, %v1669
  %v1671 = vmul.f32 %v1668, %v1670
  %v1672 = vadd.f32 %v1668, %v1671
  %vm1673 = vweird.f32 %v1652
  %vm1674 = vweird.f32 %v1668
  %vm1675 = vmor %vm1673, %vm1674
  %v1676 = vsel %vm1675, %v1668, %v1672
  %v1677 = vand.u32 2147483647, %v1652
  %vm1678 = vcmp.eq.f32.partialorder %v1677, 8.507059e+37
  %v1679 = vand.u32 %v1652, 2147483648
  %v1680 = vor.u32 1.1754944e-38, %v1679
  %v1681 = vsel %vm1678, %v1680, %v1676
  %v1682 = vmul.f32 1.0, %v1681
  %s1683 = sld [smem:[#allocation2]]
  %1685 = vset.pattern.permute.xlu0 0
  %1686 = vperm.xlu0 %1685, %v1667
  %v1687 = vpop.permute.xlu0 %1686
  %1690 = vset.pattern.permute.xlu0 0
  %1691 = vperm.xlu0 %1690, %v1682
  %v1692 = vpop.permute.xlu0 %1691
  %v1694 = vmul.f32 %v1517, %v1687
  %v1695 = vmul.f32 %v1518, %v1687
  %v1696 = vmul.f32 %v1521, %v1692
  %v1697 = vmul.f32 %v1522, %v1692
  %v1698 = vld [vmem:[%s7] sm:$0xff]
  %v1700 = vsel %vm1558, %v1698, 0
  %1702 = vmatpush.msra.mxu0 0.0
  %1703 = vmatpush.msra.mxu0 0.0
  %1704 = vmatpush.msra.mxu0 0.0
  %1705 = vmatpush.msra.mxu0 0.0
  %1706 = vmatpush.msra.mxu0 0.0
  %1707 = vmatpush.msra.mxu0 0.0
  %1708 = vmatpush.msra.mxu0 0.0
  %1709 = vmatpush.msra.mxu0 0.0
  %1710 = vmatpush.msra.mxu0 0.0
  %1711 = vmatpush.msra.mxu0 0.0
  %1712 = vmatpush.msra.mxu0 0.0
  %1713 = vmatpush.msra.mxu0 0.0
  %1714 = vmatpush.msra.mxu0 0.0
  %1715 = vmatpush.msra.mxu0 0.0
  %1716 = vmatpush.msra.mxu0 %v1696
  %1717 = vmatpush.msra.mxu0 %v1694
  %1718 = vmatmul.f32.gmra.mxu0 %v1700
  %v1719 = vpop.f32.mrf.mxu0
  %v1720 = vadd.f32 0.0, %v1719
  %1721 = vdwg.mxu0
  %1722 = vmatpush.msra.mxu0 0.0
  %1723 = vmatpush.msra.mxu0 0.0
  %1724 = vmatpush.msra.mxu0 0.0
  %1725 = vmatpush.msra.mxu0 0.0
  %1726 = vmatpush.msra.mxu0 0.0
  %1727 = vmatpush.msra.mxu0 0.0
  %1728 = vmatpush.msra.mxu0 0.0
  %1729 = vmatpush.msra.mxu0 0.0
  %1730 = vmatpush.msra.mxu0 0.0
  %1731 = vmatpush.msra.mxu0 0.0
  %1732 = vmatpush.msra.mxu0 0.0
  %1733 = vmatpush.msra.mxu0 0.0
  %1734 = vmatpush.msra.mxu0 0.0
  %1735 = vmatpush.msra.mxu0 0.0
  %1736 = vmatpush.msra.mxu0 %v1697
  %1737 = vmatpush.msra.mxu0 %v1695
  %1738 = vmatmul.f32.gmra.mxu0 %v1700
  %v1739 = vpop.f32.mrf.mxu0
  %v1740 = vadd.f32 0.0, %v1739
  %1741 = vdwg.mxu0
  %v1742 = vstv %s1683
  %v1743 = vmul.f32 %v1742, %v1720
  %v1744 = vmul.f32 %v1742, %v1740
  %v1745 = vadd.f32 %v33, %v1743
  %v1746 = vadd.f32 %v34, %v1744
  %1747 = vst [vmem:[%s9] sm:$0xff] %v1745
  %1748 = vst [vmem:[%s9 + $0x8] sm:$0xff] %v1746
  %1749 = vset.pattern.permute.xlu0 1
  %1750 = vperm.xlu0 %1749, %v1667
  %v1751 = vpop.permute.xlu0 %1750
  %1753 = vset.pattern.permute.xlu0 1
  %1754 = vperm.xlu0 %1753, %v1682
  %v1755 = vpop.permute.xlu0 %1754
  %v1757 = vmul.f32 %v1519, %v1751
  %v1758 = vmul.f32 %v1520, %v1751
  %v1759 = vmul.f32 %v1523, %v1755
  %v1760 = vmul.f32 %v1524, %v1755
  %v1761 = vld [vmem:[%s7] sm:$0xff]
  %v1763 = vsel %vm1558, %v1761, 0
  %1765 = vmatpush.msra.mxu0 0.0
  %1766 = vmatpush.msra.mxu0 0.0
  %1767 = vmatpush.msra.mxu0 0.0
  %1768 = vmatpush.msra.mxu0 0.0
  %1769 = vmatpush.msra.mxu0 0.0
  %1770 = vmatpush.msra.mxu0 0.0
  %1771 = vmatpush.msra.mxu0 0.0
  %1772 = vmatpush.msra.mxu0 0.0
  %1773 = vmatpush.msra.mxu0 0.0
  %1774 = vmatpush.msra.mxu0 0.0
  %1775 = vmatpush.msra.mxu0 0.0
  %1776 = vmatpush.msra.mxu0 0.0
  %1777 = vmatpush.msra.mxu0 0.0
  %1778 = vmatpush.msra.mxu0 0.0
  %1779 = vmatpush.msra.mxu0 %v1759
  %1780 = vmatpush.msra.mxu0 %v1757
  %1781 = vmatmul.f32.gmra.mxu0 %v1763
  %v1782 = vpop.f32.mrf.mxu0
  %v1783 = vadd.f32 0.0, %v1782
  %1784 = vdwg.mxu0
  %1785 = vmatpush.msra.mxu0 0.0
  %1786 = vmatpush.msra.mxu0 0.0
  %1787 = vmatpush.msra.mxu0 0.0
  %1788 = vmatpush.msra.mxu0 0.0
  %1789 = vmatpush.msra.mxu0 0.0
  %1790 = vmatpush.msra.mxu0 0.0
  %1791 = vmatpush.msra.mxu0 0.0
  %1792 = vmatpush.msra.mxu0 0.0
  %1793 = vmatpush.msra.mxu0 0.0
  %1794 = vmatpush.msra.mxu0 0.0
  %1795 = vmatpush.msra.mxu0 0.0
  %1796 = vmatpush.msra.mxu0 0.0
  %1797 = vmatpush.msra.mxu0 0.0
  %1798 = vmatpush.msra.mxu0 0.0
  %1799 = vmatpush.msra.mxu0 %v1760
  %1800 = vmatpush.msra.mxu0 %v1758
  %1801 = vmatmul.f32.gmra.mxu0 %v1763
  %v1802 = vpop.f32.mrf.mxu0
  %v1803 = vadd.f32 0.0, %v1802
  %1804 = vdwg.mxu0
  %v1805 = vld [vmem:[%s35] sm:$0xff]
  %v1806 = vld [vmem:[%s35 + $0x8] sm:$0xff]
  %v1807 = vmul.f32 %v1742, %v1783
  %v1808 = vmul.f32 %v1742, %v1803
  %v1809 = vadd.f32 %v1805, %v1807
  %v1810 = vadd.f32 %v1806, %v1808
  %s1811 = scalar_lea.vmem %s9, 16
  %1812 = vst [vmem:[%s1811] sm:$0xff] %v1809
  %1813 = vst [vmem:[%s1811 + $0x8] sm:$0xff] %v1810
  // Predicated region
  $region38: #{basic_bneck.1} parent=0 // pred_check
    _
  $region39: #{basic_bneck.1} parent=0 // pred_check_branch
    %1815 = sbr.rel (0) target = $region41
  $region40: #{basic_bneck.1} parent=0 // pred_region
    _
  $region41: #{basic_bneck.1} parent=0 // pred_fallthru
    _
  // Predicated region
  $region42: #{basic_bneck.1} parent=0 // pred_check
    _
  $region43: #{basic_bneck.1} parent=0 // pred_check_branch
    %1817 = sbr.rel (0) target = $region45
  $region44: #{basic_bneck.1} parent=0 // pred_region
    _
  $region45: #{basic_bneck.1} parent=0 // pred_fallthru
    _

</llo_original>
